<compile_context>
chip_gen: v7x
topology: tpu7x:2x2x1
jax: 0.10.0
libtpu: 0.0.40
codegen_flags: <defaults>
</compile_context>

<pallas_src>
import functools
import math

import jax
import jax.numpy as jnp
from jax.experimental import pallas as pl
from jax.experimental.pallas import tpu as pltpu

# ----- model config (small, CLIP-like) -----
BATCH = 2
SEQ = 8
EMBED = 32
NUM_HEADS = 4
HEAD_DIM = EMBED // NUM_HEADS
SCALE = HEAD_DIM ** (-0.5)


def _attention_kernel(x_ref, wqkv_ref, b_all_ref, wo_ref, bias_ref, o_ref,
                      *, batch, seq, embed, num_heads, head_dim, scale):
    """Single invocation: fused QKV proj -> batched multi-head attn -> out proj."""
    bt = batch * seq
    bh = batch * num_heads

    x = x_ref[...]                                           # (B*T, E)

    # Fused QKV projection: one MXU pass with 3E output lanes.
    qkv = (jnp.dot(x, wqkv_ref[...], preferred_element_type=jnp.float32)
           + b_all_ref[:, :3 * embed])                       # (B*T, 3E)

    q = qkv[:, :embed]
    k = qkv[:, embed:2 * embed]
    v = qkv[:, 2 * embed:]

    def to_heads(t):
        # (B*T, E) -> (B*H, T, Dh); matches view(B,T,H,Dh).transpose(1,2) in torch.
        return (t.reshape(batch, seq, num_heads, head_dim)
                 .transpose(0, 2, 1, 3)
                 .reshape(bh, seq, head_dim))

    qh = to_heads(q)
    kh = to_heads(k)
    vh = to_heads(v)

    attn_bias = bias_ref[...]                                # (T, T), additive float

    # Batched attention over all B*H heads: one scores contraction + one PV contraction.
    s = jnp.einsum("ntd,nsd->nts", qh, kh,
                   preferred_element_type=jnp.float32) * scale
    s = s + attn_bias[None, :, :]
    s = s - jnp.max(s, axis=-1, keepdims=True)               # stable softmax
    p = jnp.exp(s)
    p = p * pl.reciprocal(jnp.sum(p, axis=-1, keepdims=True), approx=True)

    ctx = jnp.einsum("nts,nsd->ntd", p, vh,
                     preferred_element_type=jnp.float32)     # (B*H, T, Dh)
    ctx = (ctx.reshape(batch, num_heads, seq, head_dim)
              .transpose(0, 2, 1, 3)
              .reshape(bt, embed))                           # (B*T, E)

    out = (jnp.dot(ctx, wo_ref[...], preferred_element_type=jnp.float32)
           + b_all_ref[:, 3 * embed:])
    o_ref[...] = out.astype(o_ref.dtype)


@jax.jit
def custom_attention(hidden_states, wq, bq, wk, bk, wv, bv, wo, bo, attn_bias):
    """hidden_states: (B, T, E); w*: (E, E) pre-transposed; b*: (1, E); attn_bias: (T, T)."""
    B, T, E = hidden_states.shape
    H = NUM_HEADS
    Dh = E // H

    # Wrapper-side operand packing (free XLA ops outside the kernel).
    wqkv = jnp.concatenate([wq, wk, wv], axis=1)             # (E, 3E)
    b_all = jnp.concatenate([bq, bk, bv, bo], axis=1)        # (1, 4E) = (1, 128)
    x_flat = hidden_states.reshape(B * T, E)

    kernel = functools.partial(
        _attention_kernel, batch=B, seq=T, embed=E,
        num_heads=H, head_dim=Dh, scale=Dh ** (-0.5))

    out_flat = pl.pallas_call(
        kernel,
        out_shape=jax.ShapeDtypeStruct((B * T, E), hidden_states.dtype),
        grid_spec=pltpu.PrefetchScalarGridSpec(
            num_scalar_prefetch=0,
            grid=(1,),                                        # collapsed grid: one step
            in_specs=[
                pl.BlockSpec((B * T, E), lambda i: (0, 0)),   # hidden_states (flattened)
                pl.BlockSpec((E, 3 * E), lambda i: (0, 0)),   # fused QKV weight
                pl.BlockSpec((1, 4 * E), lambda i: (0, 0)),   # packed biases [bq|bk|bv|bo]
                pl.BlockSpec((E, E), lambda i: (0, 0)),       # out_proj weight
                pl.BlockSpec((T, T), lambda i: (0, 0)),       # additive attention bias
            ],
            out_specs=pl.BlockSpec((B * T, E), lambda i: (0, 0)),
        ),
        compiler_params=pltpu.CompilerParams(
            dimension_semantics=("arbitrary",),
        ),
    )(x_flat, wqkv, b_all, wo, attn_bias)

    return out_flat.reshape(B, T, E)


def _reference(hidden_states, wq, bq, wk, bk, wv, bv, wo, bo, attn_bias):
    """Pure-JAX reference mirroring the PyTorch forward (dropout_p = 0)."""
    B, T, E = hidden_states.shape
    q = hidden_states @ wq + bq
    k = hidden_states @ wk + bk
    v = hidden_states @ wv + bv
    qh = q.reshape(B, T, NUM_HEADS, HEAD_DIM).transpose(0, 2, 1, 3)
    kh = k.reshape(B, T, NUM_HEADS, HEAD_DIM).transpose(0, 2, 1, 3)
    vh = v.reshape(B, T, NUM_HEADS, HEAD_DIM).transpose(0, 2, 1, 3)
    s = jnp.einsum("bhtd,bhsd->bhts", qh, kh) * SCALE + attn_bias[None, None]
    p = jax.nn.softmax(s, axis=-1)
    ctx = jnp.einsum("bhts,bhsd->bhtd", p, vh)
    ctx = ctx.transpose(0, 2, 1, 3).reshape(B, T, E)
    return ctx @ wo + bo


def _linear_params(key, in_dim, out_dim):
    """Deterministic nn.Linear-style init; returned W is (in, out) (pre-transposed)."""
    kw, kb = jax.random.split(key)
    bound = 1.0 / math.sqrt(in_dim)
    w = jax.random.uniform(kw, (in_dim, out_dim), jnp.float32, -bound, bound)
    b = jax.random.uniform(kb, (1, out_dim), jnp.float32, -bound, bound)
    return w, b


if __name__ == "__main__":
    root = jax.random.PRNGKey(0)
    kx, kq, kk, kv, ko = jax.random.split(root, 5)

    hidden_states = jax.random.normal(kx, (BATCH, SEQ, EMBED), jnp.float32)

    wq, bq = _linear_params(kq, EMBED, EMBED)
    wk, bk = _linear_params(kk, EMBED, EMBED)
    wv, bv = _linear_params(kv, EMBED, EMBED)
    wo, bo = _linear_params(ko, EMBED, EMBED)

    # causal additive attention mask (same role as causal_attention_mask in CLIP):
    # 0 on/below the diagonal, large negative above it.
    row = jax.lax.broadcasted_iota(jnp.int32, (SEQ, SEQ), 0)
    col = jax.lax.broadcasted_iota(jnp.int32, (SEQ, SEQ), 1)
    attn_bias = jnp.where(col <= row, 0.0, -1e9).astype(jnp.float32)

    out = custom_attention(hidden_states, wq, bq, wk, bk, wv, bv, wo, bo, attn_bias)
    out = jax.block_until_ready(out)

    ref = _reference(hidden_states, wq, bq, wk, bk, wv, bv, wo, bo, attn_bias)
    assert out.shape == (BATCH, SEQ, EMBED)
    # Tolerance loosened slightly (2e-3) to accommodate the EUP approx reciprocal
    # used for the softmax denominator; still far tighter than any layout/mask bug.
    assert jnp.allclose(out, ref, atol=2e-3, rtol=2e-3), "mismatch vs reference"

    print("KERNEL_OK")
</pallas_src>

<mosaic_0001>
module attributes {stable_mosaic.version = 11 : i64} {
  func.func @_attention_kernel(%arg0: i32, %arg1: memref<16x32xf32, #tpu.memory_space<vmem>>, %arg2: memref<32x96xf32, #tpu.memory_space<vmem>>, %arg3: memref<1x128xf32, #tpu.memory_space<vmem>>, %arg4: memref<32x32xf32, #tpu.memory_space<vmem>>, %arg5: memref<8x8xf32, #tpu.memory_space<vmem>>, %arg6: memref<16x32xf32, #tpu.memory_space<vmem>>) attributes {dimension_semantics = [#tpu.dimension_semantics<arbitrary>], iteration_bounds = array<i64: 1>, scalar_prefetch = 0 : i64, scratch_operands = 0 : i64, tpu.core_type = #tpu.core_type<tc>, window_params = [{pipeline_mode = #tpu.pipeline_mode<synchronous>, transform_indices = @transform_0, window_bounds = array<i64: 16, 32>}, {pipeline_mode = #tpu.pipeline_mode<synchronous>, transform_indices = @transform_1, window_bounds = array<i64: 32, 96>}, {pipeline_mode = #tpu.pipeline_mode<synchronous>, transform_indices = @transform_2, window_bounds = array<i64: 1, 128>}, {pipeline_mode = #tpu.pipeline_mode<synchronous>, transform_indices = @transform_3, window_bounds = array<i64: 32, 32>}, {pipeline_mode = #tpu.pipeline_mode<synchronous>, transform_indices = @transform_4, window_bounds = array<i64: 8, 8>}, {pipeline_mode = #tpu.pipeline_mode<synchronous>, transform_indices = @transform_5, window_bounds = array<i64: 16, 32>}]} {
    %c0 = arith.constant 0 : index
    %c0_0 = arith.constant 0 : index
    %0 = vector.load %arg1[%c0, %c0_0] : memref<16x32xf32, #tpu.memory_space<vmem>>, vector<16x32xf32>
    %c0_1 = arith.constant 0 : index
    %c0_2 = arith.constant 0 : index
    %1 = vector.load %arg2[%c0_1, %c0_2] : memref<32x96xf32, #tpu.memory_space<vmem>>, vector<32x96xf32>
    %cst = arith.constant dense<0.000000e+00> : vector<16x96xf32>
    %2 = tpu.matmul %0, %1, %cst {dimension_numbers = #tpu.dot_dimension_numbers<[1], [0], [0], [1], [0, 0, 1, 1], [], []>} : vector<16x32xf32>, vector<32x96xf32>, vector<16x96xf32> -> vector<16x96xf32>
    %c0_3 = arith.constant 0 : index
    %c0_4 = arith.constant 0 : index
    %3 = vector.load %arg3[%c0_3, %c0_4] : memref<1x128xf32, #tpu.memory_space<vmem>>, vector<1x96xf32>
    %4 = vector.broadcast %3 : vector<1x96xf32> to vector<16x96xf32>
    %5 = arith.addf %2, %4 : vector<16x96xf32>
    %6 = vector.extract_strided_slice %5 {offsets = [0, 0], sizes = [16, 32], strides = [1, 1]} : vector<16x96xf32> to vector<16x32xf32>
    %7 = vector.extract_strided_slice %5 {offsets = [0, 32], sizes = [16, 32], strides = [1, 1]} : vector<16x96xf32> to vector<16x32xf32>
    %8 = vector.extract_strided_slice %5 {offsets = [0, 64], sizes = [16, 32], strides = [1, 1]} : vector<16x96xf32> to vector<16x32xf32>
    %9 = vector.shape_cast %6 : vector<16x32xf32> to vector<2x8x4x8xf32>
    %10 = tpu.transpose %9, [0, 2, 1, 3] : vector<2x8x4x8xf32> -> vector<2x4x8x8xf32>
    %11 = vector.shape_cast %10 : vector<2x4x8x8xf32> to vector<8x8x8xf32>
    %12 = vector.shape_cast %7 : vector<16x32xf32> to vector<2x8x4x8xf32>
    %13 = tpu.transpose %12, [0, 2, 1, 3] : vector<2x8x4x8xf32> -> vector<2x4x8x8xf32>
    %14 = vector.shape_cast %13 : vector<2x4x8x8xf32> to vector<8x8x8xf32>
    %15 = vector.shape_cast %8 : vector<16x32xf32> to vector<2x8x4x8xf32>
    %16 = tpu.transpose %15, [0, 2, 1, 3] : vector<2x8x4x8xf32> -> vector<2x4x8x8xf32>
    %17 = vector.shape_cast %16 : vector<2x4x8x8xf32> to vector<8x8x8xf32>
    %c0_5 = arith.constant 0 : index
    %c0_6 = arith.constant 0 : index
    %18 = vector.load %arg5[%c0_5, %c0_6] : memref<8x8xf32, #tpu.memory_space<vmem>>, vector<8x8xf32>
    "tpu.trace_start"() <{level = 10 : i32, message = "ntd,nsd->nts"}> : () -> ()
    %cst_7 = arith.constant dense<0.000000e+00> : vector<8x8x8xf32>
    %19 = tpu.matmul %11, %14, %cst_7 {dimension_numbers = #tpu.dot_dimension_numbers<[2], [2], [1], [1], [0, 0, 0, 1, 1, 1], [0], [0]>} : vector<8x8x8xf32>, vector<8x8x8xf32>, vector<8x8x8xf32> -> vector<8x8x8xf32>
    "tpu.trace_stop"() : () -> ()
    %cst_8 = arith.constant 0.353553385 : f32
    %20 = vector.broadcast %cst_8 : f32 to vector<8x8x8xf32>
    %21 = arith.mulf %19, %20 : vector<8x8x8xf32>
    %22 = vector.shape_cast %18 : vector<8x8xf32> to vector<1x8x8xf32>
    %23 = vector.broadcast %22 : vector<1x8x8xf32> to vector<8x8x8xf32>
    %24 = arith.addf %21, %23 : vector<8x8x8xf32>
    %cst_9 = arith.constant dense<0xFF800000> : vector<8x8xf32>
    %25 = vector.multi_reduction <maximumf>, %24, %cst_9 [2] : vector<8x8x8xf32> to vector<8x8xf32>
    %26 = vector.shape_cast %25 : vector<8x8xf32> to vector<8x8x1xf32>
    %27 = vector.broadcast %26 : vector<8x8x1xf32> to vector<8x8x8xf32>
    %28 = arith.subf %24, %27 : vector<8x8x8xf32>
    %29 = math.exp %28 : vector<8x8x8xf32>
    %cst_10 = arith.constant dense<0.000000e+00> : vector<8x8xf32>
    %30 = vector.multi_reduction <add>, %29, %cst_10 [2] : vector<8x8x8xf32> to vector<8x8xf32>
    %31 = vector.shape_cast %30 : vector<8x8xf32> to vector<8x8x1xf32>
    %32 = tpu.reciprocal %31 {approx = true} : vector<8x8x1xf32> -> vector<8x8x1xf32>
    %33 = vector.broadcast %32 : vector<8x8x1xf32> to vector<8x8x8xf32>
    %34 = arith.mulf %29, %33 : vector<8x8x8xf32>
    "tpu.trace_start"() <{level = 10 : i32, message = "nts,nsd->ntd"}> : () -> ()
    %cst_11 = arith.constant dense<0.000000e+00> : vector<8x8x8xf32>
    %35 = tpu.matmul %34, %17, %cst_11 {dimension_numbers = #tpu.dot_dimension_numbers<[2], [1], [1], [2], [0, 0, 0, 1, 1, 2], [0], [0]>} : vector<8x8x8xf32>, vector<8x8x8xf32>, vector<8x8x8xf32> -> vector<8x8x8xf32>
    "tpu.trace_stop"() : () -> ()
    %36 = vector.shape_cast %35 : vector<8x8x8xf32> to vector<2x4x8x8xf32>
    %37 = tpu.transpose %36, [0, 2, 1, 3] : vector<2x4x8x8xf32> -> vector<2x8x4x8xf32>
    %38 = vector.shape_cast %37 : vector<2x8x4x8xf32> to vector<16x32xf32>
    %c0_12 = arith.constant 0 : index
    %c0_13 = arith.constant 0 : index
    %39 = vector.load %arg4[%c0_12, %c0_13] : memref<32x32xf32, #tpu.memory_space<vmem>>, vector<32x32xf32>
    %cst_14 = arith.constant dense<0.000000e+00> : vector<16x32xf32>
    %40 = tpu.matmul %38, %39, %cst_14 {dimension_numbers = #tpu.dot_dimension_numbers<[1], [0], [0], [1], [0, 0, 1, 1], [], []>} : vector<16x32xf32>, vector<32x32xf32>, vector<16x32xf32> -> vector<16x32xf32>
    %c0_15 = arith.constant 0 : index
    %c96 = arith.constant 96 : index
    %41 = vector.load %arg3[%c0_15, %c96] : memref<1x128xf32, #tpu.memory_space<vmem>>, vector<1x32xf32>
    %42 = vector.broadcast %41 : vector<1x32xf32> to vector<16x32xf32>
    %43 = arith.addf %40, %42 : vector<16x32xf32>
    %c0_16 = arith.constant 0 : index
    %c0_17 = arith.constant 0 : index
    %44 = vector.load %arg6[%c0_16, %c0_17] : memref<16x32xf32, #tpu.memory_space<vmem>>, vector<16x32xf32>
    tpu.vector_store %arg6[%c0_16, %c0_17], %43 {strides = array<i32>} : memref<16x32xf32, #tpu.memory_space<vmem>>, vector<16x32xf32>,
    return
  }
  func.func @transform_0(%arg0: i32) -> (i32, i32) {
    %c0_i32 = arith.constant 0 : i32
    %c0_i32_0 = arith.constant 0 : i32
    %c0_i32_1 = arith.constant 0 : i32
    return %c0_i32, %c0_i32_0 : i32, i32
  }
  func.func @transform_1(%arg0: i32) -> (i32, i32) {
    %c0_i32 = arith.constant 0 : i32
    %c0_i32_0 = arith.constant 0 : i32
    %c0_i32_1 = arith.constant 0 : i32
    return %c0_i32, %c0_i32_0 : i32, i32
  }
  func.func @transform_2(%arg0: i32) -> (i32, i32) {
    %c0_i32 = arith.constant 0 : i32
    %c0_i32_0 = arith.constant 0 : i32
    %c0_i32_1 = arith.constant 0 : i32
    return %c0_i32, %c0_i32_0 : i32, i32
  }
  func.func @transform_3(%arg0: i32) -> (i32, i32) {
    %c0_i32 = arith.constant 0 : i32
    %c0_i32_0 = arith.constant 0 : i32
    %c0_i32_1 = arith.constant 0 : i32
    return %c0_i32, %c0_i32_0 : i32, i32
  }
  func.func @transform_4(%arg0: i32) -> (i32, i32) {
    %c0_i32 = arith.constant 0 : i32
    %c0_i32_0 = arith.constant 0 : i32
    %c0_i32_1 = arith.constant 0 : i32
    return %c0_i32, %c0_i32_0 : i32, i32
  }
  func.func @transform_5(%arg0: i32) -> (i32, i32) {
    %c0_i32 = arith.constant 0 : i32
    %c0_i32_0 = arith.constant 0 : i32
    %c0_i32_1 = arith.constant 0 : i32
    return %c0_i32, %c0_i32_0 : i32, i32
  }
}

</mosaic_0001>

<llo_original>
// kernel: custom_attention.1
$region0: #{custom_attention.1}
  #allocation0 [shape = 'u32[]', space=smem, size = 0x4, offset = 0x4, fixed_abs, tag = 'smem constant byte address 0x4 - core index']
  #allocation1 [shape = 'u32[144,128]{1,0:T(1,128)}', space=vmem, size = 0x12000, scoped, tag = 'internal scratch']
  %s0 = inlined_call_operand.vmem [shape: f32[16,32], index: 0, kind: input, shape index: {}]
  %s1 = inlined_call_operand.vmem [shape: f32[32,96], index: 1, kind: input, shape index: {}]
  %s2 = inlined_call_operand.vmem [shape: f32[1,128], index: 2, kind: input, shape index: {}]
  %s3 = inlined_call_operand.vmem [shape: f32[32,32], index: 3, kind: input, shape index: {}]
  %s4 = inlined_call_operand.vmem [shape: f32[8,8], index: 4, kind: input, shape index: {}]
  %s5 = inlined_call_operand.hbm [shape: f32[16,32], index: 5, kind: output, shape index: {}]
  %s6 = sld [smem:[#allocation0]]
  $region30: #{custom_attention.1} parent=0
    _
  %s8 = ssub.s32 1, %s6
  %s9 = scalar_select 0, %s8, %s6
  $region1: #{custom_attention.1} parent=0
    #allocation2 [shape = 'u8[8192]{0}', space=vmem, size = 0x2000, scoped, tag = 'output window, operand 0, single buffered']
    #allocation3 [shape = 's32[1]{0}', space=sflag, size = 0x4, scoped, tag = 'scoped memory for custom_attention.1']
    %10 = vsyncpa [#allocation3], 0
    // Predicated region
    $region2: #{custom_attention.1} parent=1 // pred_check
      _
    $region3: #{custom_attention.1} parent=1 // pred_check_branch
      %12 = sbr.rel (0) target = $region5
    $region4: #{custom_attention.1} parent=1 // pred_region
      _
    $region5: #{custom_attention.1} parent=1 // pred_fallthru
      _
    // Predicated region
    $region6: #{custom_attention.1} parent=1 // pred_check
      _
    $region7: #{custom_attention.1} parent=1 // pred_check_branch
      %14 = sbr.rel (0) target = $region9
    $region8: #{custom_attention.1} parent=1 // pred_region
      _
    $region9: #{custom_attention.1} parent=1 // pred_fallthru
      _
    // Predicated region
    $region10: #{custom_attention.1} parent=1 // pred_check
      _
    $region11: #{custom_attention.1} parent=1 // pred_check_branch
      %16 = sbr.rel (0) target = $region13
    $region12: #{custom_attention.1} parent=1 // pred_region
      _
    $region13: #{custom_attention.1} parent=1 // pred_fallthru
      _
    // Predicated region
    $region14: #{custom_attention.1} parent=1 // pred_check
      _
    $region15: #{custom_attention.1} parent=1 // pred_check_branch
      %18 = sbr.rel (0) target = $region17
    $region16: #{custom_attention.1} parent=1 // pred_region
      _
    $region17: #{custom_attention.1} parent=1 // pred_fallthru
      _
    // Predicated region
    $region18: #{custom_attention.1} parent=1 // pred_check
      _
    $region19: #{custom_attention.1} parent=1 // pred_check_branch
      %20 = sbr.rel (0) target = $region21
    $region20: #{custom_attention.1} parent=1 // pred_region
      _
    $region21: #{custom_attention.1} parent=1 // pred_fallthru
      _
    %v21 = vld [vmem:[%s0] sm:$0xff]
    %v22 = vld [vmem:[%s0 + $0x8] sm:$0xff]
    %v23 = vld [vmem:[%s1] sm:$0xff]
    %v24 = vld [vmem:[%s1 + $0x8] sm:$0xff]
    %v25 = vld [vmem:[%s1 + $0x10] sm:$0xff]
    %v26 = vld [vmem:[%s1 + $0x18] sm:$0xff]
    %v27 = vld [vmem:[%s2] sm:$0x1]
    %v29 = vlaneseq
    %v30 = vshrl.u32 %v29, 7
    %v31 = vsub.s32 0, %v30
    %v32 = vrot.slane %v27, %v31
    %vm34 = vcmask 261120
    %v36 = vsel %vm34, %v21, 0
    %v39 = vsel %vm34, %v22, 0
    %41 = vmatprep.subr.mxu0 0.0
    %42 = vmatpush1.msra.mxu0 %v23
    %43 = vmatprep.subr.mxu0 0.0
    %44 = vmatpush1.msra.mxu0 %v24
    %45 = vmatprep.subr.mxu0 0.0
    %46 = vmatpush1.msra.mxu0 %v25
    %47 = vmatprep.subr.mxu0 0.0
    %48 = vmatpush1.msra.mxu0 %v26
    %49 = vmatprep.subr.mxu0 0.0
    %50 = vmatpush1.msra.mxu0 0.0
    %51 = vmatprep.subr.mxu0 0.0
    %52 = vmatpush1.msra.mxu0 0.0
    %53 = vmatprep.subr.mxu0 0.0
    %54 = vmatpush1.msra.mxu0 0.0
    %55 = vmatprep.subr.mxu0 0.0
    %56 = vmatpush1.msra.mxu0 0.0
    %57 = vmatprep.subr.mxu0 0.0
    %58 = vmatpush1.msra.mxu0 0.0
    %59 = vmatprep.subr.mxu0 0.0
    %60 = vmatpush1.msra.mxu0 0.0
    %61 = vmatprep.subr.mxu0 0.0
    %62 = vmatpush1.msra.mxu0 0.0
    %63 = vmatprep.subr.mxu0 0.0
    %64 = vmatpush1.msra.mxu0 0.0
    %65 = vmatprep.subr.mxu0 0.0
    %66 = vmatpush1.msra.mxu0 0.0
    %67 = vmatprep.subr.mxu0 0.0
    %68 = vmatpush1.msra.mxu0 0.0
    %69 = vmatprep.subr.mxu0 0.0
    %70 = vmatpush1.msra.mxu0 0.0
    %71 = vmatprep.subr.mxu0 0.0
    %72 = vmatpush1.msra.mxu0 0.0
    %73 = vmatprep.subr.mxu0 0.0
    %74 = vmatpush1.msra.mxu0 0.0
    %75 = vmatprep.subr.mxu0 0.0
    %76 = vmatpush1.msra.mxu0 0.0
    %77 = vmatprep.subr.mxu0 0.0
    %78 = vmatpush1.msra.mxu0 0.0
    %79 = vmatprep.subr.mxu0 0.0
    %80 = vmatpush1.msra.mxu0 0.0
    %81 = vmatprep.subr.mxu0 0.0
    %82 = vmatpush1.msra.mxu0 0.0
    %83 = vmatprep.subr.mxu0 0.0
    %84 = vmatpush1.msra.mxu0 0.0
    %85 = vmatprep.subr.mxu0 0.0
    %86 = vmatpush1.msra.mxu0 0.0
    %87 = vmatprep.subr.mxu0 0.0
    %88 = vmatpush1.msra.mxu0 0.0
    %89 = vmatprep.subr.mxu0 0.0
    %90 = vmatpush1.msra.mxu0 0.0
    %91 = vmatprep.subr.mxu0 0.0
    %92 = vmatpush1.msra.mxu0 0.0
    %93 = vmatprep.subr.mxu0 0.0
    %94 = vmatpush1.msra.mxu0 0.0
    %95 = vmatprep.subr.mxu0 0.0
    %96 = vmatpush1.msra.mxu0 0.0
    %97 = vmatprep.subr.mxu0 0.0
    %98 = vmatpush1.msra.mxu0 0.0
    %99 = vmatprep.subr.mxu0 0.0
    %100 = vmatpush1.msra.mxu0 0.0
    %101 = vmatprep.subr.mxu0 0.0
    %102 = vmatpush1.msra.mxu0 0.0
    %103 = vmatprep.subr.mxu0 0.0
    %104 = vmatpush1.msra.mxu0 0.0
    %105 = vmatprep.mubr.f32.mxu0 0.0
    %106 = vmatmul.mubr.f32.gmra.mrb[0].mxu0 %v36
    %v107 = vpop.f32.mrb[0].mxu0
    %v108 = vadd.f32 %v32, %v107
    %v109 = vpop.f32.mrb[0].mxu0
    %110 = vmatprep.mubr.f32.mxu0 0.0
    %111 = vmatmul.mubr.f32.gmra.mrb[0].mxu0 %v39
    %v112 = vpop.f32.mrb[0].mxu0
    %v113 = vadd.f32 %v32, %v112
    %v114 = vpop.f32.mrb[0].mxu0
    %115 = vdwg.mxu0
    %118 = vrot.lane.b32.xlu0 %v108, 120
    %v119 = vpop.permute.xlu0 %118
    %120 = vrot.lane.b32.xlu0 %v113, 120
    %v121 = vpop.permute.xlu0 %120
    %124 = vrot.lane.b32.xlu0 %v108, 112
    %v125 = vpop.permute.xlu0 %124
    %126 = vrot.lane.b32.xlu0 %v113, 112
    %v127 = vpop.permute.xlu0 %126
    %130 = vrot.lane.b32.xlu0 %v108, 104
    %v131 = vpop.permute.xlu0 %130
    %132 = vrot.lane.b32.xlu0 %v113, 104
    %v133 = vpop.permute.xlu0 %132
    %v136 = vcombine.low %v108, %v125
    %v137 = vcombine.high %v108, %v125
    %v139 = vunpack.c.l.s4 1983009808
    %v140 = vunpack.c.0.s8 %v139
    %v141 = vlaneseq
    %v142 = vshrl.u32 %v141, 7
    %v143 = vsub.s32 %v140, %v142
    %v144 = vrot.slane %v136, %v143
    %v146 = vunpack.c.l.s4 1983009808
    %v147 = vunpack.c.0.s8 %v146
    %v148 = vlaneseq
    %v149 = vshrl.u32 %v148, 7
    %v150 = vsub.s32 %v147, %v149
    %v151 = vrot.slane %v137, %v150
    %v152 = vcombine.low %v119, %v131
    %v153 = vcombine.high %v119, %v131
    %v155 = vunpack.c.l.s4 1983009808
    %v156 = vunpack.c.0.s8 %v155
    %v157 = vlaneseq
    %v158 = vshrl.u32 %v157, 7
    %v159 = vsub.s32 %v156, %v158
    %v160 = vrot.slane %v152, %v159
    %v162 = vunpack.c.l.s4 1983009808
    %v163 = vunpack.c.0.s8 %v162
    %v164 = vlaneseq
    %v165 = vshrl.u32 %v164, 7
    %v166 = vsub.s32 %v163, %v165
    %v167 = vrot.slane %v153, %v166
    %v168 = vcombine.low %v144, %v160
    %v169 = vcombine.high %v144, %v160
    %v171 = vunpack.c.l.s4 1934713408
    %v172 = vunpack.c.0.s8 %v171
    %v173 = vlaneseq
    %v174 = vshrl.u32 %v173, 7
    %v175 = vsub.s32 %v172, %v174
    %v176 = vrot.slane %v168, %v175
    %v178 = vunpack.c.l.s4 1934713408
    %v179 = vunpack.c.0.s8 %v178
    %v180 = vlaneseq
    %v181 = vshrl.u32 %v180, 7
    %v182 = vsub.s32 %v179, %v181
    %v183 = vrot.slane %v169, %v182
    %v184 = vcombine.low %v151, %v167
    %v185 = vcombine.high %v151, %v167
    %v187 = vunpack.c.l.s4 1934713408
    %v188 = vunpack.c.0.s8 %v187
    %v189 = vlaneseq
    %v190 = vshrl.u32 %v189, 7
    %v191 = vsub.s32 %v188, %v190
    %v192 = vrot.slane %v184, %v191
    %v194 = vunpack.c.l.s4 1934713408
    %v195 = vunpack.c.0.s8 %v194
    %v196 = vlaneseq
    %v197 = vshrl.u32 %v196, 7
    %v198 = vsub.s32 %v195, %v197
    %v199 = vrot.slane %v185, %v198
    %v200 = vcombine.high %v176, 0.0
    %v201 = vcombine.high %v183, 0.0
    %v202 = vcombine.high %v192, 0.0
    %v203 = vcombine.high %v199, 0.0
    %v204 = vcombine.low %v113, %v127
    %v205 = vcombine.high %v113, %v127
    %v207 = vunpack.c.l.s4 1983009808
    %v208 = vunpack.c.0.s8 %v207
    %v209 = vlaneseq
    %v210 = vshrl.u32 %v209, 7
    %v211 = vsub.s32 %v208, %v210
    %v212 = vrot.slane %v204, %v211
    %v214 = vunpack.c.l.s4 1983009808
    %v215 = vunpack.c.0.s8 %v214
    %v216 = vlaneseq
    %v217 = vshrl.u32 %v216, 7
    %v218 = vsub.s32 %v215, %v217
    %v219 = vrot.slane %v205, %v218
    %v220 = vcombine.low %v121, %v133
    %v221 = vcombine.high %v121, %v133
    %v223 = vunpack.c.l.s4 1983009808
    %v224 = vunpack.c.0.s8 %v223
    %v225 = vlaneseq
    %v226 = vshrl.u32 %v225, 7
    %v227 = vsub.s32 %v224, %v226
    %v228 = vrot.slane %v220, %v227
    %v230 = vunpack.c.l.s4 1983009808
    %v231 = vunpack.c.0.s8 %v230
    %v232 = vlaneseq
    %v233 = vshrl.u32 %v232, 7
    %v234 = vsub.s32 %v231, %v233
    %v235 = vrot.slane %v221, %v234
    %v236 = vcombine.low %v212, %v228
    %v237 = vcombine.high %v212, %v228
    %v239 = vunpack.c.l.s4 1934713408
    %v240 = vunpack.c.0.s8 %v239
    %v241 = vlaneseq
    %v242 = vshrl.u32 %v241, 7
    %v243 = vsub.s32 %v240, %v242
    %v244 = vrot.slane %v236, %v243
    %v246 = vunpack.c.l.s4 1934713408
    %v247 = vunpack.c.0.s8 %v246
    %v248 = vlaneseq
    %v249 = vshrl.u32 %v248, 7
    %v250 = vsub.s32 %v247, %v249
    %v251 = vrot.slane %v237, %v250
    %v252 = vcombine.low %v219, %v235
    %v253 = vcombine.high %v219, %v235
    %v255 = vunpack.c.l.s4 1934713408
    %v256 = vunpack.c.0.s8 %v255
    %v257 = vlaneseq
    %v258 = vshrl.u32 %v257, 7
    %v259 = vsub.s32 %v256, %v258
    %v260 = vrot.slane %v252, %v259
    %v262 = vunpack.c.l.s4 1934713408
    %v263 = vunpack.c.0.s8 %v262
    %v264 = vlaneseq
    %v265 = vshrl.u32 %v264, 7
    %v266 = vsub.s32 %v263, %v265
    %v267 = vrot.slane %v253, %v266
    %v268 = vcombine.high %v244, 0.0
    %v269 = vcombine.high %v251, 0.0
    %v270 = vcombine.high %v260, 0.0
    %v271 = vcombine.high %v267, 0.0
    %v272 = vcombine.low %v176, %v183
    %v274 = vunpack.c.l.s4 1983009808
    %v275 = vunpack.c.0.s8 %v274
    %v276 = vlaneseq
    %v277 = vshrl.u32 %v276, 7
    %v278 = vsub.s32 %v275, %v277
    %v279 = vrot.slane %v272, %v278
    %v280 = vcombine.low %v200, %v201
    %v282 = vunpack.c.l.s4 1983009808
    %v283 = vunpack.c.0.s8 %v282
    %v284 = vlaneseq
    %v285 = vshrl.u32 %v284, 7
    %v286 = vsub.s32 %v283, %v285
    %v287 = vrot.slane %v280, %v286
    %v288 = vcombine.low %v192, %v199
    %v290 = vunpack.c.l.s4 1983009808
    %v291 = vunpack.c.0.s8 %v290
    %v292 = vlaneseq
    %v293 = vshrl.u32 %v292, 7
    %v294 = vsub.s32 %v291, %v293
    %v295 = vrot.slane %v288, %v294
    %v296 = vcombine.low %v202, %v203
    %v298 = vunpack.c.l.s4 1983009808
    %v299 = vunpack.c.0.s8 %v298
    %v300 = vlaneseq
    %v301 = vshrl.u32 %v300, 7
    %v302 = vsub.s32 %v299, %v301
    %v303 = vrot.slane %v296, %v302
    %v304 = vcombine.low %v279, %v287
    %v305 = vcombine.high %v279, %v287
    %v307 = vunpack.c.l.s4 1934713408
    %v308 = vunpack.c.0.s8 %v307
    %v309 = vlaneseq
    %v310 = vshrl.u32 %v309, 7
    %v311 = vsub.s32 %v308, %v310
    %v312 = vrot.slane %v304, %v311
    %v314 = vunpack.c.l.s4 1934713408
    %v315 = vunpack.c.0.s8 %v314
    %v316 = vlaneseq
    %v317 = vshrl.u32 %v316, 7
    %v318 = vsub.s32 %v315, %v317
    %v319 = vrot.slane %v305, %v318
    %v320 = vcombine.low %v295, %v303
    %v321 = vcombine.high %v295, %v303
    %v323 = vunpack.c.l.s4 1934713408
    %v324 = vunpack.c.0.s8 %v323
    %v325 = vlaneseq
    %v326 = vshrl.u32 %v325, 7
    %v327 = vsub.s32 %v324, %v326
    %v328 = vrot.slane %v320, %v327
    %v330 = vunpack.c.l.s4 1934713408
    %v331 = vunpack.c.0.s8 %v330
    %v332 = vlaneseq
    %v333 = vshrl.u32 %v332, 7
    %v334 = vsub.s32 %v331, %v333
    %v335 = vrot.slane %v321, %v334
    %v336 = vcombine.low %v312, %v328
    %v337 = vcombine.high %v312, %v328
    %v338 = vcombine.low %v319, %v335
    %v339 = vcombine.high %v319, %v335
    %v340 = vcombine.low %v244, %v251
    %v342 = vunpack.c.l.s4 1983009808
    %v343 = vunpack.c.0.s8 %v342
    %v344 = vlaneseq
    %v345 = vshrl.u32 %v344, 7
    %v346 = vsub.s32 %v343, %v345
    %v347 = vrot.slane %v340, %v346
    %v348 = vcombine.low %v268, %v269
    %v350 = vunpack.c.l.s4 1983009808
    %v351 = vunpack.c.0.s8 %v350
    %v352 = vlaneseq
    %v353 = vshrl.u32 %v352, 7
    %v354 = vsub.s32 %v351, %v353
    %v355 = vrot.slane %v348, %v354
    %v356 = vcombine.low %v260, %v267
    %v358 = vunpack.c.l.s4 1983009808
    %v359 = vunpack.c.0.s8 %v358
    %v360 = vlaneseq
    %v361 = vshrl.u32 %v360, 7
    %v362 = vsub.s32 %v359, %v361
    %v363 = vrot.slane %v356, %v362
    %v364 = vcombine.low %v270, %v271
    %v366 = vunpack.c.l.s4 1983009808
    %v367 = vunpack.c.0.s8 %v366
    %v368 = vlaneseq
    %v369 = vshrl.u32 %v368, 7
    %v370 = vsub.s32 %v367, %v369
    %v371 = vrot.slane %v364, %v370
    %v372 = vcombine.low %v347, %v355
    %v373 = vcombine.high %v347, %v355
    %v375 = vunpack.c.l.s4 1934713408
    %v376 = vunpack.c.0.s8 %v375
    %v377 = vlaneseq
    %v378 = vshrl.u32 %v377, 7
    %v379 = vsub.s32 %v376, %v378
    %v380 = vrot.slane %v372, %v379
    %v382 = vunpack.c.l.s4 1934713408
    %v383 = vunpack.c.0.s8 %v382
    %v384 = vlaneseq
    %v385 = vshrl.u32 %v384, 7
    %v386 = vsub.s32 %v383, %v385
    %v387 = vrot.slane %v373, %v386
    %v388 = vcombine.low %v363, %v371
    %v389 = vcombine.high %v363, %v371
    %v391 = vunpack.c.l.s4 1934713408
    %v392 = vunpack.c.0.s8 %v391
    %v393 = vlaneseq
    %v394 = vshrl.u32 %v393, 7
    %v395 = vsub.s32 %v392, %v394
    %v396 = vrot.slane %v388, %v395
    %v398 = vunpack.c.l.s4 1934713408
    %v399 = vunpack.c.0.s8 %v398
    %v400 = vlaneseq
    %v401 = vshrl.u32 %v400, 7
    %v402 = vsub.s32 %v399, %v401
    %v403 = vrot.slane %v389, %v402
    %v404 = vcombine.low %v380, %v396
    %v405 = vcombine.high %v380, %v396
    %v406 = vcombine.low %v387, %v403
    %v407 = vcombine.high %v387, %v403
    %408 = vrot.lane.b32.xlu0 %v108, 96
    %v409 = vpop.permute.xlu0 %408
    %410 = vrot.lane.b32.xlu0 %v113, 96
    %v411 = vpop.permute.xlu0 %410
    %412 = vrot.lane.b32.xlu0 %v119, 96
    %v413 = vpop.permute.xlu0 %412
    %414 = vrot.lane.b32.xlu0 %v121, 96
    %v415 = vpop.permute.xlu0 %414
    %416 = vrot.lane.b32.xlu0 %v125, 96
    %v417 = vpop.permute.xlu0 %416
    %418 = vrot.lane.b32.xlu0 %v127, 96
    %v419 = vpop.permute.xlu0 %418
    %420 = vrot.lane.b32.xlu0 %v131, 96
    %v421 = vpop.permute.xlu0 %420
    %422 = vrot.lane.b32.xlu0 %v133, 96
    %v423 = vpop.permute.xlu0 %422
    %v432 = vcombine.low %v409, %v417
    %v433 = vcombine.high %v409, %v417
    %v435 = vunpack.c.l.s4 1983009808
    %v436 = vunpack.c.0.s8 %v435
    %v437 = vlaneseq
    %v438 = vshrl.u32 %v437, 7
    %v439 = vsub.s32 %v436, %v438
    %v440 = vrot.slane %v432, %v439
    %v442 = vunpack.c.l.s4 1983009808
    %v443 = vunpack.c.0.s8 %v442
    %v444 = vlaneseq
    %v445 = vshrl.u32 %v444, 7
    %v446 = vsub.s32 %v443, %v445
    %v447 = vrot.slane %v433, %v446
    %v448 = vcombine.low %v413, %v421
    %v449 = vcombine.high %v413, %v421
    %v451 = vunpack.c.l.s4 1983009808
    %v452 = vunpack.c.0.s8 %v451
    %v453 = vlaneseq
    %v454 = vshrl.u32 %v453, 7
    %v455 = vsub.s32 %v452, %v454
    %v456 = vrot.slane %v448, %v455
    %v458 = vunpack.c.l.s4 1983009808
    %v459 = vunpack.c.0.s8 %v458
    %v460 = vlaneseq
    %v461 = vshrl.u32 %v460, 7
    %v462 = vsub.s32 %v459, %v461
    %v463 = vrot.slane %v449, %v462
    %v464 = vcombine.low %v440, %v456
    %v465 = vcombine.high %v440, %v456
    %v467 = vunpack.c.l.s4 1934713408
    %v468 = vunpack.c.0.s8 %v467
    %v469 = vlaneseq
    %v470 = vshrl.u32 %v469, 7
    %v471 = vsub.s32 %v468, %v470
    %v472 = vrot.slane %v464, %v471
    %v474 = vunpack.c.l.s4 1934713408
    %v475 = vunpack.c.0.s8 %v474
    %v476 = vlaneseq
    %v477 = vshrl.u32 %v476, 7
    %v478 = vsub.s32 %v475, %v477
    %v479 = vrot.slane %v465, %v478
    %v480 = vcombine.low %v447, %v463
    %v481 = vcombine.high %v447, %v463
    %v483 = vunpack.c.l.s4 1934713408
    %v484 = vunpack.c.0.s8 %v483
    %v485 = vlaneseq
    %v486 = vshrl.u32 %v485, 7
    %v487 = vsub.s32 %v484, %v486
    %v488 = vrot.slane %v480, %v487
    %v490 = vunpack.c.l.s4 1934713408
    %v491 = vunpack.c.0.s8 %v490
    %v492 = vlaneseq
    %v493 = vshrl.u32 %v492, 7
    %v494 = vsub.s32 %v491, %v493
    %v495 = vrot.slane %v481, %v494
    %v496 = vcombine.high %v472, 0.0
    %v497 = vcombine.high %v479, 0.0
    %v498 = vcombine.high %v488, 0.0
    %v499 = vcombine.high %v495, 0.0
    %v500 = vcombine.low %v411, %v419
    %v501 = vcombine.high %v411, %v419
    %v503 = vunpack.c.l.s4 1983009808
    %v504 = vunpack.c.0.s8 %v503
    %v505 = vlaneseq
    %v506 = vshrl.u32 %v505, 7
    %v507 = vsub.s32 %v504, %v506
    %v508 = vrot.slane %v500, %v507
    %v510 = vunpack.c.l.s4 1983009808
    %v511 = vunpack.c.0.s8 %v510
    %v512 = vlaneseq
    %v513 = vshrl.u32 %v512, 7
    %v514 = vsub.s32 %v511, %v513
    %v515 = vrot.slane %v501, %v514
    %v516 = vcombine.low %v415, %v423
    %v517 = vcombine.high %v415, %v423
    %v519 = vunpack.c.l.s4 1983009808
    %v520 = vunpack.c.0.s8 %v519
    %v521 = vlaneseq
    %v522 = vshrl.u32 %v521, 7
    %v523 = vsub.s32 %v520, %v522
    %v524 = vrot.slane %v516, %v523
    %v526 = vunpack.c.l.s4 1983009808
    %v527 = vunpack.c.0.s8 %v526
    %v528 = vlaneseq
    %v529 = vshrl.u32 %v528, 7
    %v530 = vsub.s32 %v527, %v529
    %v531 = vrot.slane %v517, %v530
    %v532 = vcombine.low %v508, %v524
    %v533 = vcombine.high %v508, %v524
    %v535 = vunpack.c.l.s4 1934713408
    %v536 = vunpack.c.0.s8 %v535
    %v537 = vlaneseq
    %v538 = vshrl.u32 %v537, 7
    %v539 = vsub.s32 %v536, %v538
    %v540 = vrot.slane %v532, %v539
    %v542 = vunpack.c.l.s4 1934713408
    %v543 = vunpack.c.0.s8 %v542
    %v544 = vlaneseq
    %v545 = vshrl.u32 %v544, 7
    %v546 = vsub.s32 %v543, %v545
    %v547 = vrot.slane %v533, %v546
    %v548 = vcombine.low %v515, %v531
    %v549 = vcombine.high %v515, %v531
    %v551 = vunpack.c.l.s4 1934713408
    %v552 = vunpack.c.0.s8 %v551
    %v553 = vlaneseq
    %v554 = vshrl.u32 %v553, 7
    %v555 = vsub.s32 %v552, %v554
    %v556 = vrot.slane %v548, %v555
    %v558 = vunpack.c.l.s4 1934713408
    %v559 = vunpack.c.0.s8 %v558
    %v560 = vlaneseq
    %v561 = vshrl.u32 %v560, 7
    %v562 = vsub.s32 %v559, %v561
    %v563 = vrot.slane %v549, %v562
    %v564 = vcombine.high %v540, 0.0
    %v565 = vcombine.high %v547, 0.0
    %v566 = vcombine.high %v556, 0.0
    %v567 = vcombine.high %v563, 0.0
    %v568 = vcombine.low %v472, %v479
    %v570 = vunpack.c.l.s4 1983009808
    %v571 = vunpack.c.0.s8 %v570
    %v572 = vlaneseq
    %v573 = vshrl.u32 %v572, 7
    %v574 = vsub.s32 %v571, %v573
    %v575 = vrot.slane %v568, %v574
    %v576 = vcombine.low %v496, %v497
    %v578 = vunpack.c.l.s4 1983009808
    %v579 = vunpack.c.0.s8 %v578
    %v580 = vlaneseq
    %v581 = vshrl.u32 %v580, 7
    %v582 = vsub.s32 %v579, %v581
    %v583 = vrot.slane %v576, %v582
    %v584 = vcombine.low %v488, %v495
    %v586 = vunpack.c.l.s4 1983009808
    %v587 = vunpack.c.0.s8 %v586
    %v588 = vlaneseq
    %v589 = vshrl.u32 %v588, 7
    %v590 = vsub.s32 %v587, %v589
    %v591 = vrot.slane %v584, %v590
    %v592 = vcombine.low %v498, %v499
    %v594 = vunpack.c.l.s4 1983009808
    %v595 = vunpack.c.0.s8 %v594
    %v596 = vlaneseq
    %v597 = vshrl.u32 %v596, 7
    %v598 = vsub.s32 %v595, %v597
    %v599 = vrot.slane %v592, %v598
    %v600 = vcombine.low %v575, %v583
    %v601 = vcombine.high %v575, %v583
    %v603 = vunpack.c.l.s4 1934713408
    %v604 = vunpack.c.0.s8 %v603
    %v605 = vlaneseq
    %v606 = vshrl.u32 %v605, 7
    %v607 = vsub.s32 %v604, %v606
    %v608 = vrot.slane %v600, %v607
    %v610 = vunpack.c.l.s4 1934713408
    %v611 = vunpack.c.0.s8 %v610
    %v612 = vlaneseq
    %v613 = vshrl.u32 %v612, 7
    %v614 = vsub.s32 %v611, %v613
    %v615 = vrot.slane %v601, %v614
    %v616 = vcombine.low %v591, %v599
    %v617 = vcombine.high %v591, %v599
    %v619 = vunpack.c.l.s4 1934713408
    %v620 = vunpack.c.0.s8 %v619
    %v621 = vlaneseq
    %v622 = vshrl.u32 %v621, 7
    %v623 = vsub.s32 %v620, %v622
    %v624 = vrot.slane %v616, %v623
    %v626 = vunpack.c.l.s4 1934713408
    %v627 = vunpack.c.0.s8 %v626
    %v628 = vlaneseq
    %v629 = vshrl.u32 %v628, 7
    %v630 = vsub.s32 %v627, %v629
    %v631 = vrot.slane %v617, %v630
    %v632 = vcombine.low %v608, %v624
    %v633 = vcombine.high %v608, %v624
    %v634 = vcombine.low %v615, %v631
    %v635 = vcombine.high %v615, %v631
    %v636 = vcombine.low %v540, %v547
    %v638 = vunpack.c.l.s4 1983009808
    %v639 = vunpack.c.0.s8 %v638
    %v640 = vlaneseq
    %v641 = vshrl.u32 %v640, 7
    %v642 = vsub.s32 %v639, %v641
    %v643 = vrot.slane %v636, %v642
    %v644 = vcombine.low %v564, %v565
    %v646 = vunpack.c.l.s4 1983009808
    %v647 = vunpack.c.0.s8 %v646
    %v648 = vlaneseq
    %v649 = vshrl.u32 %v648, 7
    %v650 = vsub.s32 %v647, %v649
    %v651 = vrot.slane %v644, %v650
    %v652 = vcombine.low %v556, %v563
    %v654 = vunpack.c.l.s4 1983009808
    %v655 = vunpack.c.0.s8 %v654
    %v656 = vlaneseq
    %v657 = vshrl.u32 %v656, 7
    %v658 = vsub.s32 %v655, %v657
    %v659 = vrot.slane %v652, %v658
    %v660 = vcombine.low %v566, %v567
    %v662 = vunpack.c.l.s4 1983009808
    %v663 = vunpack.c.0.s8 %v662
    %v664 = vlaneseq
    %v665 = vshrl.u32 %v664, 7
    %v666 = vsub.s32 %v663, %v665
    %v667 = vrot.slane %v660, %v666
    %v668 = vcombine.low %v643, %v651
    %v669 = vcombine.high %v643, %v651
    %v671 = vunpack.c.l.s4 1934713408
    %v672 = vunpack.c.0.s8 %v671
    %v673 = vlaneseq
    %v674 = vshrl.u32 %v673, 7
    %v675 = vsub.s32 %v672, %v674
    %v676 = vrot.slane %v668, %v675
    %v678 = vunpack.c.l.s4 1934713408
    %v679 = vunpack.c.0.s8 %v678
    %v680 = vlaneseq
    %v681 = vshrl.u32 %v680, 7
    %v682 = vsub.s32 %v679, %v681
    %v683 = vrot.slane %v669, %v682
    %v684 = vcombine.low %v659, %v667
    %v685 = vcombine.high %v659, %v667
    %v687 = vunpack.c.l.s4 1934713408
    %v688 = vunpack.c.0.s8 %v687
    %v689 = vlaneseq
    %v690 = vshrl.u32 %v689, 7
    %v691 = vsub.s32 %v688, %v690
    %v692 = vrot.slane %v684, %v691
    %v694 = vunpack.c.l.s4 1934713408
    %v695 = vunpack.c.0.s8 %v694
    %v696 = vlaneseq
    %v697 = vshrl.u32 %v696, 7
    %v698 = vsub.s32 %v695, %v697
    %v699 = vrot.slane %v685, %v698
    %v700 = vcombine.low %v676, %v692
    %v701 = vcombine.high %v676, %v692
    %v702 = vcombine.low %v683, %v699
    %v703 = vcombine.high %v683, %v699
    %704 = vrot.lane.b32.xlu0 %v108, 64
    %v705 = vpop.permute.xlu0 %704
    %706 = vrot.lane.b32.xlu0 %v113, 64
    %v707 = vpop.permute.xlu0 %706
    %708 = vrot.lane.b32.xlu0 %v119, 64
    %v709 = vpop.permute.xlu0 %708
    %710 = vrot.lane.b32.xlu0 %v121, 64
    %v711 = vpop.permute.xlu0 %710
    %712 = vrot.lane.b32.xlu0 %v125, 64
    %v713 = vpop.permute.xlu0 %712
    %714 = vrot.lane.b32.xlu0 %v127, 64
    %v715 = vpop.permute.xlu0 %714
    %716 = vrot.lane.b32.xlu0 %v131, 64
    %v717 = vpop.permute.xlu0 %716
    %718 = vrot.lane.b32.xlu0 %v133, 64
    %v719 = vpop.permute.xlu0 %718
    %v728 = vcombine.low %v705, %v713
    %v729 = vcombine.high %v705, %v713
    %v731 = vunpack.c.l.s4 1983009808
    %v732 = vunpack.c.0.s8 %v731
    %v733 = vlaneseq
    %v734 = vshrl.u32 %v733, 7
    %v735 = vsub.s32 %v732, %v734
    %v736 = vrot.slane %v728, %v735
    %v738 = vunpack.c.l.s4 1983009808
    %v739 = vunpack.c.0.s8 %v738
    %v740 = vlaneseq
    %v741 = vshrl.u32 %v740, 7
    %v742 = vsub.s32 %v739, %v741
    %v743 = vrot.slane %v729, %v742
    %v744 = vcombine.low %v709, %v717
    %v745 = vcombine.high %v709, %v717
    %v747 = vunpack.c.l.s4 1983009808
    %v748 = vunpack.c.0.s8 %v747
    %v749 = vlaneseq
    %v750 = vshrl.u32 %v749, 7
    %v751 = vsub.s32 %v748, %v750
    %v752 = vrot.slane %v744, %v751
    %v754 = vunpack.c.l.s4 1983009808
    %v755 = vunpack.c.0.s8 %v754
    %v756 = vlaneseq
    %v757 = vshrl.u32 %v756, 7
    %v758 = vsub.s32 %v755, %v757
    %v759 = vrot.slane %v745, %v758
    %v760 = vcombine.low %v736, %v752
    %v761 = vcombine.high %v736, %v752
    %v763 = vunpack.c.l.s4 1934713408
    %v764 = vunpack.c.0.s8 %v763
    %v765 = vlaneseq
    %v766 = vshrl.u32 %v765, 7
    %v767 = vsub.s32 %v764, %v766
    %v768 = vrot.slane %v760, %v767
    %v770 = vunpack.c.l.s4 1934713408
    %v771 = vunpack.c.0.s8 %v770
    %v772 = vlaneseq
    %v773 = vshrl.u32 %v772, 7
    %v774 = vsub.s32 %v771, %v773
    %v775 = vrot.slane %v761, %v774
    %v776 = vcombine.low %v743, %v759
    %v777 = vcombine.high %v743, %v759
    %v779 = vunpack.c.l.s4 1934713408
    %v780 = vunpack.c.0.s8 %v779
    %v781 = vlaneseq
    %v782 = vshrl.u32 %v781, 7
    %v783 = vsub.s32 %v780, %v782
    %v784 = vrot.slane %v776, %v783
    %v786 = vunpack.c.l.s4 1934713408
    %v787 = vunpack.c.0.s8 %v786
    %v788 = vlaneseq
    %v789 = vshrl.u32 %v788, 7
    %v790 = vsub.s32 %v787, %v789
    %v791 = vrot.slane %v777, %v790
    %v792 = vcombine.high %v768, 0.0
    %v793 = vcombine.high %v775, 0.0
    %v794 = vcombine.high %v784, 0.0
    %v795 = vcombine.high %v791, 0.0
    %v796 = vcombine.low %v707, %v715
    %v797 = vcombine.high %v707, %v715
    %v799 = vunpack.c.l.s4 1983009808
    %v800 = vunpack.c.0.s8 %v799
    %v801 = vlaneseq
    %v802 = vshrl.u32 %v801, 7
    %v803 = vsub.s32 %v800, %v802
    %v804 = vrot.slane %v796, %v803
    %v806 = vunpack.c.l.s4 1983009808
    %v807 = vunpack.c.0.s8 %v806
    %v808 = vlaneseq
    %v809 = vshrl.u32 %v808, 7
    %v810 = vsub.s32 %v807, %v809
    %v811 = vrot.slane %v797, %v810
    %v812 = vcombine.low %v711, %v719
    %v813 = vcombine.high %v711, %v719
    %v815 = vunpack.c.l.s4 1983009808
    %v816 = vunpack.c.0.s8 %v815
    %v817 = vlaneseq
    %v818 = vshrl.u32 %v817, 7
    %v819 = vsub.s32 %v816, %v818
    %v820 = vrot.slane %v812, %v819
    %v822 = vunpack.c.l.s4 1983009808
    %v823 = vunpack.c.0.s8 %v822
    %v824 = vlaneseq
    %v825 = vshrl.u32 %v824, 7
    %v826 = vsub.s32 %v823, %v825
    %v827 = vrot.slane %v813, %v826
    %v828 = vcombine.low %v804, %v820
    %v829 = vcombine.high %v804, %v820
    %v831 = vunpack.c.l.s4 1934713408
    %v832 = vunpack.c.0.s8 %v831
    %v833 = vlaneseq
    %v834 = vshrl.u32 %v833, 7
    %v835 = vsub.s32 %v832, %v834
    %v836 = vrot.slane %v828, %v835
    %v838 = vunpack.c.l.s4 1934713408
    %v839 = vunpack.c.0.s8 %v838
    %v840 = vlaneseq
    %v841 = vshrl.u32 %v840, 7
    %v842 = vsub.s32 %v839, %v841
    %v843 = vrot.slane %v829, %v842
    %v844 = vcombine.low %v811, %v827
    %v845 = vcombine.high %v811, %v827
    %v847 = vunpack.c.l.s4 1934713408
    %v848 = vunpack.c.0.s8 %v847
    %v849 = vlaneseq
    %v850 = vshrl.u32 %v849, 7
    %v851 = vsub.s32 %v848, %v850
    %v852 = vrot.slane %v844, %v851
    %v854 = vunpack.c.l.s4 1934713408
    %v855 = vunpack.c.0.s8 %v854
    %v856 = vlaneseq
    %v857 = vshrl.u32 %v856, 7
    %v858 = vsub.s32 %v855, %v857
    %v859 = vrot.slane %v845, %v858
    %v860 = vcombine.high %v836, 0.0
    %v861 = vcombine.high %v843, 0.0
    %v862 = vcombine.high %v852, 0.0
    %v863 = vcombine.high %v859, 0.0
    %v864 = vcombine.low %v768, %v775
    %v866 = vunpack.c.l.s4 1983009808
    %v867 = vunpack.c.0.s8 %v866
    %v868 = vlaneseq
    %v869 = vshrl.u32 %v868, 7
    %v870 = vsub.s32 %v867, %v869
    %v871 = vrot.slane %v864, %v870
    %v872 = vcombine.low %v792, %v793
    %v874 = vunpack.c.l.s4 1983009808
    %v875 = vunpack.c.0.s8 %v874
    %v876 = vlaneseq
    %v877 = vshrl.u32 %v876, 7
    %v878 = vsub.s32 %v875, %v877
    %v879 = vrot.slane %v872, %v878
    %v880 = vcombine.low %v784, %v791
    %v882 = vunpack.c.l.s4 1983009808
    %v883 = vunpack.c.0.s8 %v882
    %v884 = vlaneseq
    %v885 = vshrl.u32 %v884, 7
    %v886 = vsub.s32 %v883, %v885
    %v887 = vrot.slane %v880, %v886
    %v888 = vcombine.low %v794, %v795
    %v890 = vunpack.c.l.s4 1983009808
    %v891 = vunpack.c.0.s8 %v890
    %v892 = vlaneseq
    %v893 = vshrl.u32 %v892, 7
    %v894 = vsub.s32 %v891, %v893
    %v895 = vrot.slane %v888, %v894
    %v896 = vcombine.low %v871, %v879
    %v897 = vcombine.high %v871, %v879
    %v899 = vunpack.c.l.s4 1934713408
    %v900 = vunpack.c.0.s8 %v899
    %v901 = vlaneseq
    %v902 = vshrl.u32 %v901, 7
    %v903 = vsub.s32 %v900, %v902
    %v904 = vrot.slane %v896, %v903
    %v906 = vunpack.c.l.s4 1934713408
    %v907 = vunpack.c.0.s8 %v906
    %v908 = vlaneseq
    %v909 = vshrl.u32 %v908, 7
    %v910 = vsub.s32 %v907, %v909
    %v911 = vrot.slane %v897, %v910
    %v912 = vcombine.low %v887, %v895
    %v913 = vcombine.high %v887, %v895
    %v915 = vunpack.c.l.s4 1934713408
    %v916 = vunpack.c.0.s8 %v915
    %v917 = vlaneseq
    %v918 = vshrl.u32 %v917, 7
    %v919 = vsub.s32 %v916, %v918
    %v920 = vrot.slane %v912, %v919
    %v922 = vunpack.c.l.s4 1934713408
    %v923 = vunpack.c.0.s8 %v922
    %v924 = vlaneseq
    %v925 = vshrl.u32 %v924, 7
    %v926 = vsub.s32 %v923, %v925
    %v927 = vrot.slane %v913, %v926
    %v928 = vcombine.low %v904, %v920
    %v929 = vcombine.high %v904, %v920
    %v930 = vcombine.low %v911, %v927
    %v931 = vcombine.high %v911, %v927
    %v932 = vcombine.low %v836, %v843
    %v934 = vunpack.c.l.s4 1983009808
    %v935 = vunpack.c.0.s8 %v934
    %v936 = vlaneseq
    %v937 = vshrl.u32 %v936, 7
    %v938 = vsub.s32 %v935, %v937
    %v939 = vrot.slane %v932, %v938
    %v940 = vcombine.low %v860, %v861
    %v942 = vunpack.c.l.s4 1983009808
    %v943 = vunpack.c.0.s8 %v942
    %v944 = vlaneseq
    %v945 = vshrl.u32 %v944, 7
    %v946 = vsub.s32 %v943, %v945
    %v947 = vrot.slane %v940, %v946
    %v948 = vcombine.low %v852, %v859
    %v950 = vunpack.c.l.s4 1983009808
    %v951 = vunpack.c.0.s8 %v950
    %v952 = vlaneseq
    %v953 = vshrl.u32 %v952, 7
    %v954 = vsub.s32 %v951, %v953
    %v955 = vrot.slane %v948, %v954
    %v956 = vcombine.low %v862, %v863
    %v958 = vunpack.c.l.s4 1983009808
    %v959 = vunpack.c.0.s8 %v958
    %v960 = vlaneseq
    %v961 = vshrl.u32 %v960, 7
    %v962 = vsub.s32 %v959, %v961
    %v963 = vrot.slane %v956, %v962
    %v964 = vcombine.low %v939, %v947
    %v965 = vcombine.high %v939, %v947
    %v967 = vunpack.c.l.s4 1934713408
    %v968 = vunpack.c.0.s8 %v967
    %v969 = vlaneseq
    %v970 = vshrl.u32 %v969, 7
    %v971 = vsub.s32 %v968, %v970
    %v972 = vrot.slane %v964, %v971
    %v974 = vunpack.c.l.s4 1934713408
    %v975 = vunpack.c.0.s8 %v974
    %v976 = vlaneseq
    %v977 = vshrl.u32 %v976, 7
    %v978 = vsub.s32 %v975, %v977
    %v979 = vrot.slane %v965, %v978
    %v980 = vcombine.low %v955, %v963
    %v981 = vcombine.high %v955, %v963
    %v983 = vunpack.c.l.s4 1934713408
    %v984 = vunpack.c.0.s8 %v983
    %v985 = vlaneseq
    %v986 = vshrl.u32 %v985, 7
    %v987 = vsub.s32 %v984, %v986
    %v988 = vrot.slane %v980, %v987
    %v990 = vunpack.c.l.s4 1934713408
    %v991 = vunpack.c.0.s8 %v990
    %v992 = vlaneseq
    %v993 = vshrl.u32 %v992, 7
    %v994 = vsub.s32 %v991, %v993
    %v995 = vrot.slane %v981, %v994
    %v996 = vcombine.low %v972, %v988
    %v997 = vcombine.high %v972, %v988
    %v998 = vcombine.low %v979, %v995
    %v999 = vcombine.high %v979, %v995
    %v1000 = vld [vmem:[%s4] sm:$0xff]
    %vm1001 = vcmask 64512
    %v1003 = vsel %vm1001, %v336, 0
    %v1006 = vsel %vm1001, %v632, 0
    %1008 = vmatprep.subr.mxu0 0.0
    %1009 = vmatpush1.xpose.msra.mxu0 %v1006
    %1010 = vmatprep.subr.mxu0 0.0
    %1011 = vmatpush1.xpose.msra.mxu0 0.0
    %1012 = vmatprep.subr.mxu0 0.0
    %1013 = vmatpush1.xpose.msra.mxu0 0.0
    %1014 = vmatprep.subr.mxu0 0.0
    %1015 = vmatpush1.xpose.msra.mxu0 0.0
    %1016 = vmatprep.subr.mxu0 0.0
    %1017 = vmatpush1.xpose.msra.mxu0 0.0
    %1018 = vmatprep.subr.mxu0 0.0
    %1019 = vmatpush1.xpose.msra.mxu0 0.0
    %1020 = vmatprep.subr.mxu0 0.0
    %1021 = vmatpush1.xpose.msra.mxu0 0.0
    %1022 = vmatprep.subr.mxu0 0.0
    %1023 = vmatpush1.xpose.msra.mxu0 0.0
    %1024 = vmatprep.subr.mxu0 0.0
    %1025 = vmatpush1.xpose.msra.mxu0 0.0
    %1026 = vmatprep.subr.mxu0 0.0
    %1027 = vmatpush1.xpose.msra.mxu0 0.0
    %1028 = vmatprep.subr.mxu0 0.0
    %1029 = vmatpush1.xpose.msra.mxu0 0.0
    %1030 = vmatprep.subr.mxu0 0.0
    %1031 = vmatpush1.xpose.msra.mxu0 0.0
    %1032 = vmatprep.subr.mxu0 0.0
    %1033 = vmatpush1.xpose.msra.mxu0 0.0
    %1034 = vmatprep.subr.mxu0 0.0
    %1035 = vmatpush1.xpose.msra.mxu0 0.0
    %1036 = vmatprep.subr.mxu0 0.0
    %1037 = vmatpush1.xpose.msra.mxu0 0.0
    %1038 = vmatprep.subr.mxu0 0.0
    %1039 = vmatpush1.xpose.msra.mxu0 0.0
    %1040 = vmatprep.subr.mxu0 0.0
    %1041 = vmatpush1.xpose.msra.mxu0 0.0
    %1042 = vmatprep.subr.mxu0 0.0
    %1043 = vmatpush1.xpose.msra.mxu0 0.0
    %1044 = vmatprep.subr.mxu0 0.0
    %1045 = vmatpush1.xpose.msra.mxu0 0.0
    %1046 = vmatprep.subr.mxu0 0.0
    %1047 = vmatpush1.xpose.msra.mxu0 0.0
    %1048 = vmatprep.subr.mxu0 0.0
    %1049 = vmatpush1.xpose.msra.mxu0 0.0
    %1050 = vmatprep.subr.mxu0 0.0
    %1051 = vmatpush1.xpose.msra.mxu0 0.0
    %1052 = vmatprep.subr.mxu0 0.0
    %1053 = vmatpush1.xpose.msra.mxu0 0.0
    %1054 = vmatprep.subr.mxu0 0.0
    %1055 = vmatpush1.xpose.msra.mxu0 0.0
    %1056 = vmatprep.subr.mxu0 0.0
    %1057 = vmatpush1.xpose.msra.mxu0 0.0
    %1058 = vmatprep.subr.mxu0 0.0
    %1059 = vmatpush1.xpose.msra.mxu0 0.0
    %1060 = vmatprep.subr.mxu0 0.0
    %1061 = vmatpush1.xpose.msra.mxu0 0.0
    %1062 = vmatprep.subr.mxu0 0.0
    %1063 = vmatpush1.xpose.msra.mxu0 0.0
    %1064 = vmatprep.subr.mxu0 0.0
    %1065 = vmatpush1.xpose.msra.mxu0 0.0
    %1066 = vmatprep.subr.mxu0 0.0
    %1067 = vmatpush1.xpose.msra.mxu0 0.0
    %1068 = vmatprep.subr.mxu0 0.0
    %1069 = vmatpush1.xpose.msra.mxu0 0.0
    %1070 = vmatprep.subr.mxu0 0.0
    %1071 = vmatpush1.xpose.msra.mxu0 0.0
    %1072 = vmatprep.mubr.f32.mxu0 0.0
    %1073 = vmatmul.mubr.f32.gmra.mrb[0].mxu0 %v1003
    %v1074 = vpop.f32.mrb[0].mxu0
    %v1075 = vadd.f32 0.0, %v1074
    %v1076 = vpop.f32.mrb[0].mxu0
    %1077 = vdwg.mxu0
    %v1079 = vsel %vm1001, %v337, 0
    %v1082 = vsel %vm1001, %v633, 0
    %1084 = vmatprep.subr.mxu0 0.0
    %1085 = vmatpush1.xpose.msra.mxu0 %v1082
    %1086 = vmatprep.subr.mxu0 0.0
    %1087 = vmatpush1.xpose.msra.mxu0 0.0
    %1088 = vmatprep.subr.mxu0 0.0
    %1089 = vmatpush1.xpose.msra.mxu0 0.0
    %1090 = vmatprep.subr.mxu0 0.0
    %1091 = vmatpush1.xpose.msra.mxu0 0.0
    %1092 = vmatprep.subr.mxu0 0.0
    %1093 = vmatpush1.xpose.msra.mxu0 0.0
    %1094 = vmatprep.subr.mxu0 0.0
    %1095 = vmatpush1.xpose.msra.mxu0 0.0
    %1096 = vmatprep.subr.mxu0 0.0
    %1097 = vmatpush1.xpose.msra.mxu0 0.0
    %1098 = vmatprep.subr.mxu0 0.0
    %1099 = vmatpush1.xpose.msra.mxu0 0.0
    %1100 = vmatprep.subr.mxu0 0.0
    %1101 = vmatpush1.xpose.msra.mxu0 0.0
    %1102 = vmatprep.subr.mxu0 0.0
    %1103 = vmatpush1.xpose.msra.mxu0 0.0
    %1104 = vmatprep.subr.mxu0 0.0
    %1105 = vmatpush1.xpose.msra.mxu0 0.0
    %1106 = vmatprep.subr.mxu0 0.0
    %1107 = vmatpush1.xpose.msra.mxu0 0.0
    %1108 = vmatprep.subr.mxu0 0.0
    %1109 = vmatpush1.xpose.msra.mxu0 0.0
    %1110 = vmatprep.subr.mxu0 0.0
    %1111 = vmatpush1.xpose.msra.mxu0 0.0
    %1112 = vmatprep.subr.mxu0 0.0
    %1113 = vmatpush1.xpose.msra.mxu0 0.0
    %1114 = vmatprep.subr.mxu0 0.0
    %1115 = vmatpush1.xpose.msra.mxu0 0.0
    %1116 = vmatprep.subr.mxu0 0.0
    %1117 = vmatpush1.xpose.msra.mxu0 0.0
    %1118 = vmatprep.subr.mxu0 0.0
    %1119 = vmatpush1.xpose.msra.mxu0 0.0
    %1120 = vmatprep.subr.mxu0 0.0
    %1121 = vmatpush1.xpose.msra.mxu0 0.0
    %1122 = vmatprep.subr.mxu0 0.0
    %1123 = vmatpush1.xpose.msra.mxu0 0.0
    %1124 = vmatprep.subr.mxu0 0.0
    %1125 = vmatpush1.xpose.msra.mxu0 0.0
    %1126 = vmatprep.subr.mxu0 0.0
    %1127 = vmatpush1.xpose.msra.mxu0 0.0
    %1128 = vmatprep.subr.mxu0 0.0
    %1129 = vmatpush1.xpose.msra.mxu0 0.0
    %1130 = vmatprep.subr.mxu0 0.0
    %1131 = vmatpush1.xpose.msra.mxu0 0.0
    %1132 = vmatprep.subr.mxu0 0.0
    %1133 = vmatpush1.xpose.msra.mxu0 0.0
    %1134 = vmatprep.subr.mxu0 0.0
    %1135 = vmatpush1.xpose.msra.mxu0 0.0
    %1136 = vmatprep.subr.mxu0 0.0
    %1137 = vmatpush1.xpose.msra.mxu0 0.0
    %1138 = vmatprep.subr.mxu0 0.0
    %1139 = vmatpush1.xpose.msra.mxu0 0.0
    %1140 = vmatprep.subr.mxu0 0.0
    %1141 = vmatpush1.xpose.msra.mxu0 0.0
    %1142 = vmatprep.subr.mxu0 0.0
    %1143 = vmatpush1.xpose.msra.mxu0 0.0
    %1144 = vmatprep.subr.mxu0 0.0
    %1145 = vmatpush1.xpose.msra.mxu0 0.0
    %1146 = vmatprep.subr.mxu0 0.0
    %1147 = vmatpush1.xpose.msra.mxu0 0.0
    %1148 = vmatprep.mubr.f32.mxu0 0.0
    %1149 = vmatmul.mubr.f32.gmra.mrb[0].mxu0 %v1079
    %v1150 = vpop.f32.mrb[0].mxu0
    %v1151 = vadd.f32 0.0, %v1150
    %v1152 = vpop.f32.mrb[0].mxu0
    %1153 = vdwg.mxu0
    %v1155 = vsel %vm1001, %v338, 0
    %v1158 = vsel %vm1001, %v634, 0
    %1160 = vmatprep.subr.mxu0 0.0
    %1161 = vmatpush1.xpose.msra.mxu0 %v1158
    %1162 = vmatprep.subr.mxu0 0.0
    %1163 = vmatpush1.xpose.msra.mxu0 0.0
    %1164 = vmatprep.subr.mxu0 0.0
    %1165 = vmatpush1.xpose.msra.mxu0 0.0
    %1166 = vmatprep.subr.mxu0 0.0
    %1167 = vmatpush1.xpose.msra.mxu0 0.0
    %1168 = vmatprep.subr.mxu0 0.0
    %1169 = vmatpush1.xpose.msra.mxu0 0.0
    %1170 = vmatprep.subr.mxu0 0.0
    %1171 = vmatpush1.xpose.msra.mxu0 0.0
    %1172 = vmatprep.subr.mxu0 0.0
    %1173 = vmatpush1.xpose.msra.mxu0 0.0
    %1174 = vmatprep.subr.mxu0 0.0
    %1175 = vmatpush1.xpose.msra.mxu0 0.0
    %1176 = vmatprep.subr.mxu0 0.0
    %1177 = vmatpush1.xpose.msra.mxu0 0.0
    %1178 = vmatprep.subr.mxu0 0.0
    %1179 = vmatpush1.xpose.msra.mxu0 0.0
    %1180 = vmatprep.subr.mxu0 0.0
    %1181 = vmatpush1.xpose.msra.mxu0 0.0
    %1182 = vmatprep.subr.mxu0 0.0
    %1183 = vmatpush1.xpose.msra.mxu0 0.0
    %1184 = vmatprep.subr.mxu0 0.0
    %1185 = vmatpush1.xpose.msra.mxu0 0.0
    %1186 = vmatprep.subr.mxu0 0.0
    %1187 = vmatpush1.xpose.msra.mxu0 0.0
    %1188 = vmatprep.subr.mxu0 0.0
    %1189 = vmatpush1.xpose.msra.mxu0 0.0
    %1190 = vmatprep.subr.mxu0 0.0
    %1191 = vmatpush1.xpose.msra.mxu0 0.0
    %1192 = vmatprep.subr.mxu0 0.0
    %1193 = vmatpush1.xpose.msra.mxu0 0.0
    %1194 = vmatprep.subr.mxu0 0.0
    %1195 = vmatpush1.xpose.msra.mxu0 0.0
    %1196 = vmatprep.subr.mxu0 0.0
    %1197 = vmatpush1.xpose.msra.mxu0 0.0
    %1198 = vmatprep.subr.mxu0 0.0
    %1199 = vmatpush1.xpose.msra.mxu0 0.0
    %1200 = vmatprep.subr.mxu0 0.0
    %1201 = vmatpush1.xpose.msra.mxu0 0.0
    %1202 = vmatprep.subr.mxu0 0.0
    %1203 = vmatpush1.xpose.msra.mxu0 0.0
    %1204 = vmatprep.subr.mxu0 0.0
    %1205 = vmatpush1.xpose.msra.mxu0 0.0
    %1206 = vmatprep.subr.mxu0 0.0
    %1207 = vmatpush1.xpose.msra.mxu0 0.0
    %1208 = vmatprep.subr.mxu0 0.0
    %1209 = vmatpush1.xpose.msra.mxu0 0.0
    %1210 = vmatprep.subr.mxu0 0.0
    %1211 = vmatpush1.xpose.msra.mxu0 0.0
    %1212 = vmatprep.subr.mxu0 0.0
    %1213 = vmatpush1.xpose.msra.mxu0 0.0
    %1214 = vmatprep.subr.mxu0 0.0
    %1215 = vmatpush1.xpose.msra.mxu0 0.0
    %1216 = vmatprep.subr.mxu0 0.0
    %1217 = vmatpush1.xpose.msra.mxu0 0.0
    %1218 = vmatprep.subr.mxu0 0.0
    %1219 = vmatpush1.xpose.msra.mxu0 0.0
    %1220 = vmatprep.subr.mxu0 0.0
    %1221 = vmatpush1.xpose.msra.mxu0 0.0
    %1222 = vmatprep.subr.mxu0 0.0
    %1223 = vmatpush1.xpose.msra.mxu0 0.0
    %1224 = vmatprep.mubr.f32.mxu0 0.0
    %1225 = vmatmul.mubr.f32.gmra.mrb[0].mxu0 %v1155
    %v1226 = vpop.f32.mrb[0].mxu0
    %v1227 = vadd.f32 0.0, %v1226
    %v1228 = vpop.f32.mrb[0].mxu0
    %1229 = vdwg.mxu0
    %v1231 = vsel %vm1001, %v339, 0
    %v1234 = vsel %vm1001, %v635, 0
    %1236 = vmatprep.subr.mxu0 0.0
    %1237 = vmatpush1.xpose.msra.mxu0 %v1234
    %1238 = vmatprep.subr.mxu0 0.0
    %1239 = vmatpush1.xpose.msra.mxu0 0.0
    %1240 = vmatprep.subr.mxu0 0.0
    %1241 = vmatpush1.xpose.msra.mxu0 0.0
    %1242 = vmatprep.subr.mxu0 0.0
    %1243 = vmatpush1.xpose.msra.mxu0 0.0
    %1244 = vmatprep.subr.mxu0 0.0
    %1245 = vmatpush1.xpose.msra.mxu0 0.0
    %1246 = vmatprep.subr.mxu0 0.0
    %1247 = vmatpush1.xpose.msra.mxu0 0.0
    %1248 = vmatprep.subr.mxu0 0.0
    %1249 = vmatpush1.xpose.msra.mxu0 0.0
    %1250 = vmatprep.subr.mxu0 0.0
    %1251 = vmatpush1.xpose.msra.mxu0 0.0
    %1252 = vmatprep.subr.mxu0 0.0
    %1253 = vmatpush1.xpose.msra.mxu0 0.0
    %1254 = vmatprep.subr.mxu0 0.0
    %1255 = vmatpush1.xpose.msra.mxu0 0.0
    %1256 = vmatprep.subr.mxu0 0.0
    %1257 = vmatpush1.xpose.msra.mxu0 0.0
    %1258 = vmatprep.subr.mxu0 0.0
    %1259 = vmatpush1.xpose.msra.mxu0 0.0
    %1260 = vmatprep.subr.mxu0 0.0
    %1261 = vmatpush1.xpose.msra.mxu0 0.0
    %1262 = vmatprep.subr.mxu0 0.0
    %1263 = vmatpush1.xpose.msra.mxu0 0.0
    %1264 = vmatprep.subr.mxu0 0.0
    %1265 = vmatpush1.xpose.msra.mxu0 0.0
    %1266 = vmatprep.subr.mxu0 0.0
    %1267 = vmatpush1.xpose.msra.mxu0 0.0
    %1268 = vmatprep.subr.mxu0 0.0
    %1269 = vmatpush1.xpose.msra.mxu0 0.0
    %1270 = vmatprep.subr.mxu0 0.0
    %1271 = vmatpush1.xpose.msra.mxu0 0.0
    %1272 = vmatprep.subr.mxu0 0.0
    %1273 = vmatpush1.xpose.msra.mxu0 0.0
    %1274 = vmatprep.subr.mxu0 0.0
    %1275 = vmatpush1.xpose.msra.mxu0 0.0
    %1276 = vmatprep.subr.mxu0 0.0
    %1277 = vmatpush1.xpose.msra.mxu0 0.0
    %1278 = vmatprep.subr.mxu0 0.0
    %1279 = vmatpush1.xpose.msra.mxu0 0.0
    %1280 = vmatprep.subr.mxu0 0.0
    %1281 = vmatpush1.xpose.msra.mxu0 0.0
    %1282 = vmatprep.subr.mxu0 0.0
    %1283 = vmatpush1.xpose.msra.mxu0 0.0
    %1284 = vmatprep.subr.mxu0 0.0
    %1285 = vmatpush1.xpose.msra.mxu0 0.0
    %1286 = vmatprep.subr.mxu0 0.0
    %1287 = vmatpush1.xpose.msra.mxu0 0.0
    %1288 = vmatprep.subr.mxu0 0.0
    %1289 = vmatpush1.xpose.msra.mxu0 0.0
    %1290 = vmatprep.subr.mxu0 0.0
    %1291 = vmatpush1.xpose.msra.mxu0 0.0
    %1292 = vmatprep.subr.mxu0 0.0
    %1293 = vmatpush1.xpose.msra.mxu0 0.0
    %1294 = vmatprep.subr.mxu0 0.0
    %1295 = vmatpush1.xpose.msra.mxu0 0.0
    %1296 = vmatprep.subr.mxu0 0.0
    %1297 = vmatpush1.xpose.msra.mxu0 0.0
    %1298 = vmatprep.subr.mxu0 0.0
    %1299 = vmatpush1.xpose.msra.mxu0 0.0
    %1300 = vmatprep.mubr.f32.mxu0 0.0
    %1301 = vmatmul.mubr.f32.gmra.mrb[0].mxu0 %v1231
    %v1302 = vpop.f32.mrb[0].mxu0
    %v1303 = vadd.f32 0.0, %v1302
    %v1304 = vpop.f32.mrb[0].mxu0
    %1305 = vdwg.mxu0
    %v1307 = vsel %vm1001, %v404, 0
    %v1310 = vsel %vm1001, %v700, 0
    %1312 = vmatprep.subr.mxu0 0.0
    %1313 = vmatpush1.xpose.msra.mxu0 %v1310
    %1314 = vmatprep.subr.mxu0 0.0
    %1315 = vmatpush1.xpose.msra.mxu0 0.0
    %1316 = vmatprep.subr.mxu0 0.0
    %1317 = vmatpush1.xpose.msra.mxu0 0.0
    %1318 = vmatprep.subr.mxu0 0.0
    %1319 = vmatpush1.xpose.msra.mxu0 0.0
    %1320 = vmatprep.subr.mxu0 0.0
    %1321 = vmatpush1.xpose.msra.mxu0 0.0
    %1322 = vmatprep.subr.mxu0 0.0
    %1323 = vmatpush1.xpose.msra.mxu0 0.0
    %1324 = vmatprep.subr.mxu0 0.0
    %1325 = vmatpush1.xpose.msra.mxu0 0.0
    %1326 = vmatprep.subr.mxu0 0.0
    %1327 = vmatpush1.xpose.msra.mxu0 0.0
    %1328 = vmatprep.subr.mxu0 0.0
    %1329 = vmatpush1.xpose.msra.mxu0 0.0
    %1330 = vmatprep.subr.mxu0 0.0
    %1331 = vmatpush1.xpose.msra.mxu0 0.0
    %1332 = vmatprep.subr.mxu0 0.0
    %1333 = vmatpush1.xpose.msra.mxu0 0.0
    %1334 = vmatprep.subr.mxu0 0.0
    %1335 = vmatpush1.xpose.msra.mxu0 0.0
    %1336 = vmatprep.subr.mxu0 0.0
    %1337 = vmatpush1.xpose.msra.mxu0 0.0
    %1338 = vmatprep.subr.mxu0 0.0
    %1339 = vmatpush1.xpose.msra.mxu0 0.0
    %1340 = vmatprep.subr.mxu0 0.0
    %1341 = vmatpush1.xpose.msra.mxu0 0.0
    %1342 = vmatprep.subr.mxu0 0.0
    %1343 = vmatpush1.xpose.msra.mxu0 0.0
    %1344 = vmatprep.subr.mxu0 0.0
    %1345 = vmatpush1.xpose.msra.mxu0 0.0
    %1346 = vmatprep.subr.mxu0 0.0
    %1347 = vmatpush1.xpose.msra.mxu0 0.0
    %1348 = vmatprep.subr.mxu0 0.0
    %1349 = vmatpush1.xpose.msra.mxu0 0.0
    %1350 = vmatprep.subr.mxu0 0.0
    %1351 = vmatpush1.xpose.msra.mxu0 0.0
    %1352 = vmatprep.subr.mxu0 0.0
    %1353 = vmatpush1.xpose.msra.mxu0 0.0
    %1354 = vmatprep.subr.mxu0 0.0
    %1355 = vmatpush1.xpose.msra.mxu0 0.0
    %1356 = vmatprep.subr.mxu0 0.0
    %1357 = vmatpush1.xpose.msra.mxu0 0.0
    %1358 = vmatprep.subr.mxu0 0.0
    %1359 = vmatpush1.xpose.msra.mxu0 0.0
    %1360 = vmatprep.subr.mxu0 0.0
    %1361 = vmatpush1.xpose.msra.mxu0 0.0
    %1362 = vmatprep.subr.mxu0 0.0
    %1363 = vmatpush1.xpose.msra.mxu0 0.0
    %1364 = vmatprep.subr.mxu0 0.0
    %1365 = vmatpush1.xpose.msra.mxu0 0.0
    %1366 = vmatprep.subr.mxu0 0.0
    %1367 = vmatpush1.xpose.msra.mxu0 0.0
    %1368 = vmatprep.subr.mxu0 0.0
    %1369 = vmatpush1.xpose.msra.mxu0 0.0
    %1370 = vmatprep.subr.mxu0 0.0
    %1371 = vmatpush1.xpose.msra.mxu0 0.0
    %1372 = vmatprep.subr.mxu0 0.0
    %1373 = vmatpush1.xpose.msra.mxu0 0.0
    %1374 = vmatprep.subr.mxu0 0.0
    %1375 = vmatpush1.xpose.msra.mxu0 0.0
    %1376 = vmatprep.mubr.f32.mxu0 0.0
    %1377 = vmatmul.mubr.f32.gmra.mrb[0].mxu0 %v1307
    %v1378 = vpop.f32.mrb[0].mxu0
    %v1379 = vadd.f32 0.0, %v1378
    %v1380 = vpop.f32.mrb[0].mxu0
    %1381 = vdwg.mxu0
    %v1383 = vsel %vm1001, %v405, 0
    %v1386 = vsel %vm1001, %v701, 0
    %1388 = vmatprep.subr.mxu0 0.0
    %1389 = vmatpush1.xpose.msra.mxu0 %v1386
    %1390 = vmatprep.subr.mxu0 0.0
    %1391 = vmatpush1.xpose.msra.mxu0 0.0
    %1392 = vmatprep.subr.mxu0 0.0
    %1393 = vmatpush1.xpose.msra.mxu0 0.0
    %1394 = vmatprep.subr.mxu0 0.0
    %1395 = vmatpush1.xpose.msra.mxu0 0.0
    %1396 = vmatprep.subr.mxu0 0.0
    %1397 = vmatpush1.xpose.msra.mxu0 0.0
    %1398 = vmatprep.subr.mxu0 0.0
    %1399 = vmatpush1.xpose.msra.mxu0 0.0
    %1400 = vmatprep.subr.mxu0 0.0
    %1401 = vmatpush1.xpose.msra.mxu0 0.0
    %1402 = vmatprep.subr.mxu0 0.0
    %1403 = vmatpush1.xpose.msra.mxu0 0.0
    %1404 = vmatprep.subr.mxu0 0.0
    %1405 = vmatpush1.xpose.msra.mxu0 0.0
    %1406 = vmatprep.subr.mxu0 0.0
    %1407 = vmatpush1.xpose.msra.mxu0 0.0
    %1408 = vmatprep.subr.mxu0 0.0
    %1409 = vmatpush1.xpose.msra.mxu0 0.0
    %1410 = vmatprep.subr.mxu0 0.0
    %1411 = vmatpush1.xpose.msra.mxu0 0.0
    %1412 = vmatprep.subr.mxu0 0.0
    %1413 = vmatpush1.xpose.msra.mxu0 0.0
    %1414 = vmatprep.subr.mxu0 0.0
    %1415 = vmatpush1.xpose.msra.mxu0 0.0
    %1416 = vmatprep.subr.mxu0 0.0
    %1417 = vmatpush1.xpose.msra.mxu0 0.0
    %1418 = vmatprep.subr.mxu0 0.0
    %1419 = vmatpush1.xpose.msra.mxu0 0.0
    %1420 = vmatprep.subr.mxu0 0.0
    %1421 = vmatpush1.xpose.msra.mxu0 0.0
    %1422 = vmatprep.subr.mxu0 0.0
    %1423 = vmatpush1.xpose.msra.mxu0 0.0
    %1424 = vmatprep.subr.mxu0 0.0
    %1425 = vmatpush1.xpose.msra.mxu0 0.0
    %1426 = vmatprep.subr.mxu0 0.0
    %1427 = vmatpush1.xpose.msra.mxu0 0.0
    %1428 = vmatprep.subr.mxu0 0.0
    %1429 = vmatpush1.xpose.msra.mxu0 0.0
    %1430 = vmatprep.subr.mxu0 0.0
    %1431 = vmatpush1.xpose.msra.mxu0 0.0
    %1432 = vmatprep.subr.mxu0 0.0
    %1433 = vmatpush1.xpose.msra.mxu0 0.0
    %1434 = vmatprep.subr.mxu0 0.0
    %1435 = vmatpush1.xpose.msra.mxu0 0.0
    %1436 = vmatprep.subr.mxu0 0.0
    %1437 = vmatpush1.xpose.msra.mxu0 0.0
    %1438 = vmatprep.subr.mxu0 0.0
    %1439 = vmatpush1.xpose.msra.mxu0 0.0
    %1440 = vmatprep.subr.mxu0 0.0
    %1441 = vmatpush1.xpose.msra.mxu0 0.0
    %1442 = vmatprep.subr.mxu0 0.0
    %1443 = vmatpush1.xpose.msra.mxu0 0.0
    %1444 = vmatprep.subr.mxu0 0.0
    %1445 = vmatpush1.xpose.msra.mxu0 0.0
    %1446 = vmatprep.subr.mxu0 0.0
    %1447 = vmatpush1.xpose.msra.mxu0 0.0
    %1448 = vmatprep.subr.mxu0 0.0
    %1449 = vmatpush1.xpose.msra.mxu0 0.0
    %1450 = vmatprep.subr.mxu0 0.0
    %1451 = vmatpush1.xpose.msra.mxu0 0.0
    %1452 = vmatprep.mubr.f32.mxu0 0.0
    %1453 = vmatmul.mubr.f32.gmra.mrb[0].mxu0 %v1383
    %v1454 = vpop.f32.mrb[0].mxu0
    %v1455 = vadd.f32 0.0, %v1454
    %v1456 = vpop.f32.mrb[0].mxu0
    %1457 = vdwg.mxu0
    %v1459 = vsel %vm1001, %v406, 0
    %v1462 = vsel %vm1001, %v702, 0
    %1464 = vmatprep.subr.mxu0 0.0
    %1465 = vmatpush1.xpose.msra.mxu0 %v1462
    %1466 = vmatprep.subr.mxu0 0.0
    %1467 = vmatpush1.xpose.msra.mxu0 0.0
    %1468 = vmatprep.subr.mxu0 0.0
    %1469 = vmatpush1.xpose.msra.mxu0 0.0
    %1470 = vmatprep.subr.mxu0 0.0
    %1471 = vmatpush1.xpose.msra.mxu0 0.0
    %1472 = vmatprep.subr.mxu0 0.0
    %1473 = vmatpush1.xpose.msra.mxu0 0.0
    %1474 = vmatprep.subr.mxu0 0.0
    %1475 = vmatpush1.xpose.msra.mxu0 0.0
    %1476 = vmatprep.subr.mxu0 0.0
    %1477 = vmatpush1.xpose.msra.mxu0 0.0
    %1478 = vmatprep.subr.mxu0 0.0
    %1479 = vmatpush1.xpose.msra.mxu0 0.0
    %1480 = vmatprep.subr.mxu0 0.0
    %1481 = vmatpush1.xpose.msra.mxu0 0.0
    %1482 = vmatprep.subr.mxu0 0.0
    %1483 = vmatpush1.xpose.msra.mxu0 0.0
    %1484 = vmatprep.subr.mxu0 0.0
    %1485 = vmatpush1.xpose.msra.mxu0 0.0
    %1486 = vmatprep.subr.mxu0 0.0
    %1487 = vmatpush1.xpose.msra.mxu0 0.0
    %1488 = vmatprep.subr.mxu0 0.0
    %1489 = vmatpush1.xpose.msra.mxu0 0.0
    %1490 = vmatprep.subr.mxu0 0.0
    %1491 = vmatpush1.xpose.msra.mxu0 0.0
    %1492 = vmatprep.subr.mxu0 0.0
    %1493 = vmatpush1.xpose.msra.mxu0 0.0
    %1494 = vmatprep.subr.mxu0 0.0
    %1495 = vmatpush1.xpose.msra.mxu0 0.0
    %1496 = vmatprep.subr.mxu0 0.0
    %1497 = vmatpush1.xpose.msra.mxu0 0.0
    %1498 = vmatprep.subr.mxu0 0.0
    %1499 = vmatpush1.xpose.msra.mxu0 0.0
    %1500 = vmatprep.subr.mxu0 0.0
    %1501 = vmatpush1.xpose.msra.mxu0 0.0
    %1502 = vmatprep.subr.mxu0 0.0
    %1503 = vmatpush1.xpose.msra.mxu0 0.0
    %1504 = vmatprep.subr.mxu0 0.0
    %1505 = vmatpush1.xpose.msra.mxu0 0.0
    %1506 = vmatprep.subr.mxu0 0.0
    %1507 = vmatpush1.xpose.msra.mxu0 0.0
    %1508 = vmatprep.subr.mxu0 0.0
    %1509 = vmatpush1.xpose.msra.mxu0 0.0
    %1510 = vmatprep.subr.mxu0 0.0
    %1511 = vmatpush1.xpose.msra.mxu0 0.0
    %1512 = vmatprep.subr.mxu0 0.0
    %1513 = vmatpush1.xpose.msra.mxu0 0.0
    %1514 = vmatprep.subr.mxu0 0.0
    %1515 = vmatpush1.xpose.msra.mxu0 0.0
    %1516 = vmatprep.subr.mxu0 0.0
    %1517 = vmatpush1.xpose.msra.mxu0 0.0
    %1518 = vmatprep.subr.mxu0 0.0
    %1519 = vmatpush1.xpose.msra.mxu0 0.0
    %1520 = vmatprep.subr.mxu0 0.0
    %1521 = vmatpush1.xpose.msra.mxu0 0.0
    %1522 = vmatprep.subr.mxu0 0.0
    %1523 = vmatpush1.xpose.msra.mxu0 0.0
    %1524 = vmatprep.subr.mxu0 0.0
    %1525 = vmatpush1.xpose.msra.mxu0 0.0
    %1526 = vmatprep.subr.mxu0 0.0
    %1527 = vmatpush1.xpose.msra.mxu0 0.0
    %1528 = vmatprep.mubr.f32.mxu0 0.0
    %1529 = vmatmul.mubr.f32.gmra.mrb[0].mxu0 %v1459
    %v1530 = vpop.f32.mrb[0].mxu0
    %v1531 = vadd.f32 0.0, %v1530
    %v1532 = vpop.f32.mrb[0].mxu0
    %1533 = vdwg.mxu0
    %v1535 = vsel %vm1001, %v407, 0
    %v1538 = vsel %vm1001, %v703, 0
    %1540 = vmatprep.subr.mxu0 0.0
    %1541 = vmatpush1.xpose.msra.mxu0 %v1538
    %1542 = vmatprep.subr.mxu0 0.0
    %1543 = vmatpush1.xpose.msra.mxu0 0.0
    %1544 = vmatprep.subr.mxu0 0.0
    %1545 = vmatpush1.xpose.msra.mxu0 0.0
    %1546 = vmatprep.subr.mxu0 0.0
    %1547 = vmatpush1.xpose.msra.mxu0 0.0
    %1548 = vmatprep.subr.mxu0 0.0
    %1549 = vmatpush1.xpose.msra.mxu0 0.0
    %1550 = vmatprep.subr.mxu0 0.0
    %1551 = vmatpush1.xpose.msra.mxu0 0.0
    %1552 = vmatprep.subr.mxu0 0.0
    %1553 = vmatpush1.xpose.msra.mxu0 0.0
    %1554 = vmatprep.subr.mxu0 0.0
    %1555 = vmatpush1.xpose.msra.mxu0 0.0
    %1556 = vmatprep.subr.mxu0 0.0
    %1557 = vmatpush1.xpose.msra.mxu0 0.0
    %1558 = vmatprep.subr.mxu0 0.0
    %1559 = vmatpush1.xpose.msra.mxu0 0.0
    %1560 = vmatprep.subr.mxu0 0.0
    %1561 = vmatpush1.xpose.msra.mxu0 0.0
    %1562 = vmatprep.subr.mxu0 0.0
    %1563 = vmatpush1.xpose.msra.mxu0 0.0
    %1564 = vmatprep.subr.mxu0 0.0
    %1565 = vmatpush1.xpose.msra.mxu0 0.0
    %1566 = vmatprep.subr.mxu0 0.0
    %1567 = vmatpush1.xpose.msra.mxu0 0.0
    %1568 = vmatprep.subr.mxu0 0.0
    %1569 = vmatpush1.xpose.msra.mxu0 0.0
    %1570 = vmatprep.subr.mxu0 0.0
    %1571 = vmatpush1.xpose.msra.mxu0 0.0
    %1572 = vmatprep.subr.mxu0 0.0
    %1573 = vmatpush1.xpose.msra.mxu0 0.0
    %1574 = vmatprep.subr.mxu0 0.0
    %1575 = vmatpush1.xpose.msra.mxu0 0.0
    %1576 = vmatprep.subr.mxu0 0.0
    %1577 = vmatpush1.xpose.msra.mxu0 0.0
    %1578 = vmatprep.subr.mxu0 0.0
    %1579 = vmatpush1.xpose.msra.mxu0 0.0
    %1580 = vmatprep.subr.mxu0 0.0
    %1581 = vmatpush1.xpose.msra.mxu0 0.0
    %1582 = vmatprep.subr.mxu0 0.0
    %1583 = vmatpush1.xpose.msra.mxu0 0.0
    %1584 = vmatprep.subr.mxu0 0.0
    %1585 = vmatpush1.xpose.msra.mxu0 0.0
    %1586 = vmatprep.subr.mxu0 0.0
    %1587 = vmatpush1.xpose.msra.mxu0 0.0
    %1588 = vmatprep.subr.mxu0 0.0
    %1589 = vmatpush1.xpose.msra.mxu0 0.0
    %1590 = vmatprep.subr.mxu0 0.0
    %1591 = vmatpush1.xpose.msra.mxu0 0.0
    %1592 = vmatprep.subr.mxu0 0.0
    %1593 = vmatpush1.xpose.msra.mxu0 0.0
    %1594 = vmatprep.subr.mxu0 0.0
    %1595 = vmatpush1.xpose.msra.mxu0 0.0
    %1596 = vmatprep.subr.mxu0 0.0
    %1597 = vmatpush1.xpose.msra.mxu0 0.0
    %1598 = vmatprep.subr.mxu0 0.0
    %1599 = vmatpush1.xpose.msra.mxu0 0.0
    %1600 = vmatprep.subr.mxu0 0.0
    %1601 = vmatpush1.xpose.msra.mxu0 0.0
    %1602 = vmatprep.subr.mxu0 0.0
    %1603 = vmatpush1.xpose.msra.mxu0 0.0
    %1604 = vmatprep.mubr.f32.mxu0 0.0
    %1605 = vmatmul.mubr.f32.gmra.mrb[0].mxu0 %v1535
    %v1606 = vpop.f32.mrb[0].mxu0
    %v1607 = vadd.f32 0.0, %v1606
    %v1608 = vpop.f32.mrb[0].mxu0
    %1609 = vdwg.mxu0
    %v1610 = vmul.f32 %v1075, 0.35355338
    %v1611 = vmul.f32 %v1151, 0.35355338
    %v1612 = vmul.f32 %v1227, 0.35355338
    %v1613 = vmul.f32 %v1303, 0.35355338
    %v1614 = vmul.f32 %v1379, 0.35355338
    %v1615 = vmul.f32 %v1455, 0.35355338
    %v1616 = vmul.f32 %v1531, 0.35355338
    %v1617 = vmul.f32 %v1607, 0.35355338
    %v1618 = vadd.f32 %v1610, %v1000
    %v1619 = vadd.f32 %v1611, %v1000
    %v1620 = vadd.f32 %v1612, %v1000
    %v1621 = vadd.f32 %v1613, %v1000
    %v1622 = vadd.f32 %v1614, %v1000
    %v1623 = vadd.f32 %v1615, %v1000
    %v1624 = vadd.f32 %v1616, %v1000
    %v1625 = vadd.f32 %v1617, %v1000
    %v1626 = vsel %vm1001, %v1618, -inf
    %1627 = vmax.xlane.f32.xlu0 %v1626
    %v1628 = vpop.xlane.xlu0 %1627
    %v1629 = vsel %vm1001, %v1619, -inf
    %1630 = vmax.xlane.f32.xlu0 %v1629
    %v1631 = vpop.xlane.xlu0 %1630
    %v1632 = vsel %vm1001, %v1620, -inf
    %1633 = vmax.xlane.f32.xlu0 %v1632
    %v1634 = vpop.xlane.xlu0 %1633
    %v1635 = vsel %vm1001, %v1621, -inf
    %1636 = vmax.xlane.f32.xlu0 %v1635
    %v1637 = vpop.xlane.xlu0 %1636
    %v1638 = vsel %vm1001, %v1622, -inf
    %1639 = vmax.xlane.f32.xlu0 %v1638
    %v1640 = vpop.xlane.xlu0 %1639
    %v1641 = vsel %vm1001, %v1623, -inf
    %1642 = vmax.xlane.f32.xlu0 %v1641
    %v1643 = vpop.xlane.xlu0 %1642
    %v1644 = vsel %vm1001, %v1624, -inf
    %1645 = vmax.xlane.f32.xlu0 %v1644
    %v1646 = vpop.xlane.xlu0 %1645
    %v1647 = vsel %vm1001, %v1625, -inf
    %1648 = vmax.xlane.f32.xlu0 %v1647
    %v1649 = vpop.xlane.xlu0 %1648
    %v1650 = vsub.f32 %v1618, %v1628
    %v1651 = vsub.f32 %v1619, %v1631
    %v1652 = vsub.f32 %v1620, %v1634
    %v1653 = vsub.f32 %v1621, %v1637
    %v1654 = vsub.f32 %v1622, %v1640
    %v1655 = vsub.f32 %v1623, %v1643
    %v1656 = vsub.f32 %v1624, %v1646
    %v1657 = vsub.f32 %v1625, %v1649
    %v1658 = vmul.f32 %v1650, 1.442695
    %v1659 = vpow.pop %v1658
    %v1660 = vmul.f32 %v1651, 1.442695
    %v1661 = vpow.pop %v1660
    %v1662 = vmul.f32 %v1652, 1.442695
    %v1663 = vpow.pop %v1662
    %v1664 = vmul.f32 %v1653, 1.442695
    %v1665 = vpow.pop %v1664
    %v1666 = vmul.f32 %v1654, 1.442695
    %v1667 = vpow.pop %v1666
    %v1668 = vmul.f32 %v1655, 1.442695
    %v1669 = vpow.pop %v1668
    %v1670 = vmul.f32 %v1656, 1.442695
    %v1671 = vpow.pop %v1670
    %v1672 = vmul.f32 %v1657, 1.442695
    %v1673 = vpow.pop %v1672
    %v1674 = vsel %vm1001, %v1659, 0.0
    %1675 = vadd.xlane.f32.xlu0 %v1674
    %v1676 = vpop.xlane.xlu0 %1675
    %v1677 = vsel %vm1001, %v1661, 0.0
    %1678 = vadd.xlane.f32.xlu0 %v1677
    %v1679 = vpop.xlane.xlu0 %1678
    %v1680 = vsel %vm1001, %v1663, 0.0
    %1681 = vadd.xlane.f32.xlu0 %v1680
    %v1682 = vpop.xlane.xlu0 %1681
    %v1683 = vsel %vm1001, %v1665, 0.0
    %1684 = vadd.xlane.f32.xlu0 %v1683
    %v1685 = vpop.xlane.xlu0 %1684
    %v1686 = vsel %vm1001, %v1667, 0.0
    %1687 = vadd.xlane.f32.xlu0 %v1686
    %v1688 = vpop.xlane.xlu0 %1687
    %v1689 = vsel %vm1001, %v1669, 0.0
    %1690 = vadd.xlane.f32.xlu0 %v1689
    %v1691 = vpop.xlane.xlu0 %1690
    %v1692 = vsel %vm1001, %v1671, 0.0
    %1693 = vadd.xlane.f32.xlu0 %v1692
    %v1694 = vpop.xlane.xlu0 %1693
    %v1695 = vsel %vm1001, %v1673, 0.0
    %1696 = vadd.xlane.f32.xlu0 %v1695
    %v1697 = vpop.xlane.xlu0 %1696
    %v1698 = vrcp.pop %v1676
    %v1699 = vrcp.pop %v1679
    %v1700 = vrcp.pop %v1682
    %v1701 = vrcp.pop %v1685
    %v1702 = vrcp.pop %v1688
    %v1703 = vrcp.pop %v1691
    %v1704 = vrcp.pop %v1694
    %v1705 = vrcp.pop %v1697
    %v1706 = vmul.f32 %v1659, %v1698
    %v1707 = vmul.f32 %v1661, %v1699
    %v1708 = vmul.f32 %v1663, %v1700
    %v1709 = vmul.f32 %v1665, %v1701
    %v1710 = vmul.f32 %v1667, %v1702
    %v1711 = vmul.f32 %v1669, %v1703
    %v1712 = vmul.f32 %v1671, %v1704
    %v1713 = vmul.f32 %v1673, %v1705
    %v1715 = vsel %vm1001, %v1706, 0
    %1717 = vmatprep.subr.mxu0 0.0
    %1718 = vmatpush1.msra.mxu0 %v928
    %1719 = vmatprep.subr.mxu0 0.0
    %1720 = vmatpush1.msra.mxu0 0.0
    %1721 = vmatprep.subr.mxu0 0.0
    %1722 = vmatpush1.msra.mxu0 0.0
    %1723 = vmatprep.subr.mxu0 0.0
    %1724 = vmatpush1.msra.mxu0 0.0
    %1725 = vmatprep.subr.mxu0 0.0
    %1726 = vmatpush1.msra.mxu0 0.0
    %1727 = vmatprep.subr.mxu0 0.0
    %1728 = vmatpush1.msra.mxu0 0.0
    %1729 = vmatprep.subr.mxu0 0.0
    %1730 = vmatpush1.msra.mxu0 0.0
    %1731 = vmatprep.subr.mxu0 0.0
    %1732 = vmatpush1.msra.mxu0 0.0
    %1733 = vmatprep.subr.mxu0 0.0
    %1734 = vmatpush1.msra.mxu0 0.0
    %1735 = vmatprep.subr.mxu0 0.0
    %1736 = vmatpush1.msra.mxu0 0.0
    %1737 = vmatprep.subr.mxu0 0.0
    %1738 = vmatpush1.msra.mxu0 0.0
    %1739 = vmatprep.subr.mxu0 0.0
    %1740 = vmatpush1.msra.mxu0 0.0
    %1741 = vmatprep.subr.mxu0 0.0
    %1742 = vmatpush1.msra.mxu0 0.0
    %1743 = vmatprep.subr.mxu0 0.0
    %1744 = vmatpush1.msra.mxu0 0.0
    %1745 = vmatprep.subr.mxu0 0.0
    %1746 = vmatpush1.msra.mxu0 0.0
    %1747 = vmatprep.subr.mxu0 0.0
    %1748 = vmatpush1.msra.mxu0 0.0
    %1749 = vmatprep.subr.mxu0 0.0
    %1750 = vmatpush1.msra.mxu0 0.0
    %1751 = vmatprep.subr.mxu0 0.0
    %1752 = vmatpush1.msra.mxu0 0.0
    %1753 = vmatprep.subr.mxu0 0.0
    %1754 = vmatpush1.msra.mxu0 0.0
    %1755 = vmatprep.subr.mxu0 0.0
    %1756 = vmatpush1.msra.mxu0 0.0
    %1757 = vmatprep.subr.mxu0 0.0
    %1758 = vmatpush1.msra.mxu0 0.0
    %1759 = vmatprep.subr.mxu0 0.0
    %1760 = vmatpush1.msra.mxu0 0.0
    %1761 = vmatprep.subr.mxu0 0.0
    %1762 = vmatpush1.msra.mxu0 0.0
    %1763 = vmatprep.subr.mxu0 0.0
    %1764 = vmatpush1.msra.mxu0 0.0
    %1765 = vmatprep.subr.mxu0 0.0
    %1766 = vmatpush1.msra.mxu0 0.0
    %1767 = vmatprep.subr.mxu0 0.0
    %1768 = vmatpush1.msra.mxu0 0.0
    %1769 = vmatprep.subr.mxu0 0.0
    %1770 = vmatpush1.msra.mxu0 0.0
    %1771 = vmatprep.subr.mxu0 0.0
    %1772 = vmatpush1.msra.mxu0 0.0
    %1773 = vmatprep.subr.mxu0 0.0
    %1774 = vmatpush1.msra.mxu0 0.0
    %1775 = vmatprep.subr.mxu0 0.0
    %1776 = vmatpush1.msra.mxu0 0.0
    %1777 = vmatprep.subr.mxu0 0.0
    %1778 = vmatpush1.msra.mxu0 0.0
    %1779 = vmatprep.subr.mxu0 0.0
    %1780 = vmatpush1.msra.mxu0 0.0
    %1781 = vmatprep.mubr.f32.mxu0 0.0
    %1782 = vmatmul.mubr.f32.gmra.mrb[0].mxu0 %v1715
    %v1783 = vpop.f32.mrb[0].mxu0
    %v1784 = vadd.f32 0.0, %v1783
    %v1785 = vpop.f32.mrb[0].mxu0
    %1786 = vdwg.mxu0
    %v1788 = vsel %vm1001, %v1707, 0
    %1790 = vmatprep.subr.mxu0 0.0
    %1791 = vmatpush1.msra.mxu0 %v929
    %1792 = vmatprep.subr.mxu0 0.0
    %1793 = vmatpush1.msra.mxu0 0.0
    %1794 = vmatprep.subr.mxu0 0.0
    %1795 = vmatpush1.msra.mxu0 0.0
    %1796 = vmatprep.subr.mxu0 0.0
    %1797 = vmatpush1.msra.mxu0 0.0
    %1798 = vmatprep.subr.mxu0 0.0
    %1799 = vmatpush1.msra.mxu0 0.0
    %1800 = vmatprep.subr.mxu0 0.0
    %1801 = vmatpush1.msra.mxu0 0.0
    %1802 = vmatprep.subr.mxu0 0.0
    %1803 = vmatpush1.msra.mxu0 0.0
    %1804 = vmatprep.subr.mxu0 0.0
    %1805 = vmatpush1.msra.mxu0 0.0
    %1806 = vmatprep.subr.mxu0 0.0
    %1807 = vmatpush1.msra.mxu0 0.0
    %1808 = vmatprep.subr.mxu0 0.0
    %1809 = vmatpush1.msra.mxu0 0.0
    %1810 = vmatprep.subr.mxu0 0.0
    %1811 = vmatpush1.msra.mxu0 0.0
    %1812 = vmatprep.subr.mxu0 0.0
    %1813 = vmatpush1.msra.mxu0 0.0
    %1814 = vmatprep.subr.mxu0 0.0
    %1815 = vmatpush1.msra.mxu0 0.0
    %1816 = vmatprep.subr.mxu0 0.0
    %1817 = vmatpush1.msra.mxu0 0.0
    %1818 = vmatprep.subr.mxu0 0.0
    %1819 = vmatpush1.msra.mxu0 0.0
    %1820 = vmatprep.subr.mxu0 0.0
    %1821 = vmatpush1.msra.mxu0 0.0
    %1822 = vmatprep.subr.mxu0 0.0
    %1823 = vmatpush1.msra.mxu0 0.0
    %1824 = vmatprep.subr.mxu0 0.0
    %1825 = vmatpush1.msra.mxu0 0.0
    %1826 = vmatprep.subr.mxu0 0.0
    %1827 = vmatpush1.msra.mxu0 0.0
    %1828 = vmatprep.subr.mxu0 0.0
    %1829 = vmatpush1.msra.mxu0 0.0
    %1830 = vmatprep.subr.mxu0 0.0
    %1831 = vmatpush1.msra.mxu0 0.0
    %1832 = vmatprep.subr.mxu0 0.0
    %1833 = vmatpush1.msra.mxu0 0.0
    %1834 = vmatprep.subr.mxu0 0.0
    %1835 = vmatpush1.msra.mxu0 0.0
    %1836 = vmatprep.subr.mxu0 0.0
    %1837 = vmatpush1.msra.mxu0 0.0
    %1838 = vmatprep.subr.mxu0 0.0
    %1839 = vmatpush1.msra.mxu0 0.0
    %1840 = vmatprep.subr.mxu0 0.0
    %1841 = vmatpush1.msra.mxu0 0.0
    %1842 = vmatprep.subr.mxu0 0.0
    %1843 = vmatpush1.msra.mxu0 0.0
    %1844 = vmatprep.subr.mxu0 0.0
    %1845 = vmatpush1.msra.mxu0 0.0
    %1846 = vmatprep.subr.mxu0 0.0
    %1847 = vmatpush1.msra.mxu0 0.0
    %1848 = vmatprep.subr.mxu0 0.0
    %1849 = vmatpush1.msra.mxu0 0.0
    %1850 = vmatprep.subr.mxu0 0.0
    %1851 = vmatpush1.msra.mxu0 0.0
    %1852 = vmatprep.subr.mxu0 0.0
    %1853 = vmatpush1.msra.mxu0 0.0
    %1854 = vmatprep.mubr.f32.mxu0 0.0
    %1855 = vmatmul.mubr.f32.gmra.mrb[0].mxu0 %v1788
    %v1856 = vpop.f32.mrb[0].mxu0
    %v1857 = vadd.f32 0.0, %v1856
    %v1858 = vpop.f32.mrb[0].mxu0
    %1859 = vdwg.mxu0
    %v1861 = vsel %vm1001, %v1708, 0
    %1863 = vmatprep.subr.mxu0 0.0
    %1864 = vmatpush1.msra.mxu0 %v930
    %1865 = vmatprep.subr.mxu0 0.0
    %1866 = vmatpush1.msra.mxu0 0.0
    %1867 = vmatprep.subr.mxu0 0.0
    %1868 = vmatpush1.msra.mxu0 0.0
    %1869 = vmatprep.subr.mxu0 0.0
    %1870 = vmatpush1.msra.mxu0 0.0
    %1871 = vmatprep.subr.mxu0 0.0
    %1872 = vmatpush1.msra.mxu0 0.0
    %1873 = vmatprep.subr.mxu0 0.0
    %1874 = vmatpush1.msra.mxu0 0.0
    %1875 = vmatprep.subr.mxu0 0.0
    %1876 = vmatpush1.msra.mxu0 0.0
    %1877 = vmatprep.subr.mxu0 0.0
    %1878 = vmatpush1.msra.mxu0 0.0
    %1879 = vmatprep.subr.mxu0 0.0
    %1880 = vmatpush1.msra.mxu0 0.0
    %1881 = vmatprep.subr.mxu0 0.0
    %1882 = vmatpush1.msra.mxu0 0.0
    %1883 = vmatprep.subr.mxu0 0.0
    %1884 = vmatpush1.msra.mxu0 0.0
    %1885 = vmatprep.subr.mxu0 0.0
    %1886 = vmatpush1.msra.mxu0 0.0
    %1887 = vmatprep.subr.mxu0 0.0
    %1888 = vmatpush1.msra.mxu0 0.0
    %1889 = vmatprep.subr.mxu0 0.0
    %1890 = vmatpush1.msra.mxu0 0.0
    %1891 = vmatprep.subr.mxu0 0.0
    %1892 = vmatpush1.msra.mxu0 0.0
    %1893 = vmatprep.subr.mxu0 0.0
    %1894 = vmatpush1.msra.mxu0 0.0
    %1895 = vmatprep.subr.mxu0 0.0
    %1896 = vmatpush1.msra.mxu0 0.0
    %1897 = vmatprep.subr.mxu0 0.0
    %1898 = vmatpush1.msra.mxu0 0.0
    %1899 = vmatprep.subr.mxu0 0.0
    %1900 = vmatpush1.msra.mxu0 0.0
    %1901 = vmatprep.subr.mxu0 0.0
    %1902 = vmatpush1.msra.mxu0 0.0
    %1903 = vmatprep.subr.mxu0 0.0
    %1904 = vmatpush1.msra.mxu0 0.0
    %1905 = vmatprep.subr.mxu0 0.0
    %1906 = vmatpush1.msra.mxu0 0.0
    %1907 = vmatprep.subr.mxu0 0.0
    %1908 = vmatpush1.msra.mxu0 0.0
    %1909 = vmatprep.subr.mxu0 0.0
    %1910 = vmatpush1.msra.mxu0 0.0
    %1911 = vmatprep.subr.mxu0 0.0
    %1912 = vmatpush1.msra.mxu0 0.0
    %1913 = vmatprep.subr.mxu0 0.0
    %1914 = vmatpush1.msra.mxu0 0.0
    %1915 = vmatprep.subr.mxu0 0.0
    %1916 = vmatpush1.msra.mxu0 0.0
    %1917 = vmatprep.subr.mxu0 0.0
    %1918 = vmatpush1.msra.mxu0 0.0
    %1919 = vmatprep.subr.mxu0 0.0
    %1920 = vmatpush1.msra.mxu0 0.0
    %1921 = vmatprep.subr.mxu0 0.0
    %1922 = vmatpush1.msra.mxu0 0.0
    %1923 = vmatprep.subr.mxu0 0.0
    %1924 = vmatpush1.msra.mxu0 0.0
    %1925 = vmatprep.subr.mxu0 0.0
    %1926 = vmatpush1.msra.mxu0 0.0
    %1927 = vmatprep.mubr.f32.mxu0 0.0
    %1928 = vmatmul.mubr.f32.gmra.mrb[0].mxu0 %v1861
    %v1929 = vpop.f32.mrb[0].mxu0
    %v1930 = vadd.f32 0.0, %v1929
    %v1931 = vpop.f32.mrb[0].mxu0
    %1932 = vdwg.mxu0
    %v1934 = vsel %vm1001, %v1709, 0
    %1936 = vmatprep.subr.mxu0 0.0
    %1937 = vmatpush1.msra.mxu0 %v931
    %1938 = vmatprep.subr.mxu0 0.0
    %1939 = vmatpush1.msra.mxu0 0.0
    %1940 = vmatprep.subr.mxu0 0.0
    %1941 = vmatpush1.msra.mxu0 0.0
    %1942 = vmatprep.subr.mxu0 0.0
    %1943 = vmatpush1.msra.mxu0 0.0
    %1944 = vmatprep.subr.mxu0 0.0
    %1945 = vmatpush1.msra.mxu0 0.0
    %1946 = vmatprep.subr.mxu0 0.0
    %1947 = vmatpush1.msra.mxu0 0.0
    %1948 = vmatprep.subr.mxu0 0.0
    %1949 = vmatpush1.msra.mxu0 0.0
    %1950 = vmatprep.subr.mxu0 0.0
    %1951 = vmatpush1.msra.mxu0 0.0
    %1952 = vmatprep.subr.mxu0 0.0
    %1953 = vmatpush1.msra.mxu0 0.0
    %1954 = vmatprep.subr.mxu0 0.0
    %1955 = vmatpush1.msra.mxu0 0.0
    %1956 = vmatprep.subr.mxu0 0.0
    %1957 = vmatpush1.msra.mxu0 0.0
    %1958 = vmatprep.subr.mxu0 0.0
    %1959 = vmatpush1.msra.mxu0 0.0
    %1960 = vmatprep.subr.mxu0 0.0
    %1961 = vmatpush1.msra.mxu0 0.0
    %1962 = vmatprep.subr.mxu0 0.0
    %1963 = vmatpush1.msra.mxu0 0.0
    %1964 = vmatprep.subr.mxu0 0.0
    %1965 = vmatpush1.msra.mxu0 0.0
    %1966 = vmatprep.subr.mxu0 0.0
    %1967 = vmatpush1.msra.mxu0 0.0
    %1968 = vmatprep.subr.mxu0 0.0
    %1969 = vmatpush1.msra.mxu0 0.0
    %1970 = vmatprep.subr.mxu0 0.0
    %1971 = vmatpush1.msra.mxu0 0.0
    %1972 = vmatprep.subr.mxu0 0.0
    %1973 = vmatpush1.msra.mxu0 0.0
    %1974 = vmatprep.subr.mxu0 0.0
    %1975 = vmatpush1.msra.mxu0 0.0
    %1976 = vmatprep.subr.mxu0 0.0
    %1977 = vmatpush1.msra.mxu0 0.0
    %1978 = vmatprep.subr.mxu0 0.0
    %1979 = vmatpush1.msra.mxu0 0.0
    %1980 = vmatprep.subr.mxu0 0.0
    %1981 = vmatpush1.msra.mxu0 0.0
    %1982 = vmatprep.subr.mxu0 0.0
    %1983 = vmatpush1.msra.mxu0 0.0
    %1984 = vmatprep.subr.mxu0 0.0
    %1985 = vmatpush1.msra.mxu0 0.0
    %1986 = vmatprep.subr.mxu0 0.0
    %1987 = vmatpush1.msra.mxu0 0.0
    %1988 = vmatprep.subr.mxu0 0.0
    %1989 = vmatpush1.msra.mxu0 0.0
    %1990 = vmatprep.subr.mxu0 0.0
    %1991 = vmatpush1.msra.mxu0 0.0
    %1992 = vmatprep.subr.mxu0 0.0
    %1993 = vmatpush1.msra.mxu0 0.0
    %1994 = vmatprep.subr.mxu0 0.0
    %1995 = vmatpush1.msra.mxu0 0.0
    %1996 = vmatprep.subr.mxu0 0.0
    %1997 = vmatpush1.msra.mxu0 0.0
    %1998 = vmatprep.subr.mxu0 0.0
    %1999 = vmatpush1.msra.mxu0 0.0
    %2000 = vmatprep.mubr.f32.mxu0 0.0
    %2001 = vmatmul.mubr.f32.gmra.mrb[0].mxu0 %v1934
    %v2002 = vpop.f32.mrb[0].mxu0
    %v2003 = vadd.f32 0.0, %v2002
    %v2004 = vpop.f32.mrb[0].mxu0
    %2005 = vdwg.mxu0
    %v2007 = vsel %vm1001, %v1710, 0
    %2009 = vmatprep.subr.mxu0 0.0
    %2010 = vmatpush1.msra.mxu0 %v996
    %2011 = vmatprep.subr.mxu0 0.0
    %2012 = vmatpush1.msra.mxu0 0.0
    %2013 = vmatprep.subr.mxu0 0.0
    %2014 = vmatpush1.msra.mxu0 0.0
    %2015 = vmatprep.subr.mxu0 0.0
    %2016 = vmatpush1.msra.mxu0 0.0
    %2017 = vmatprep.subr.mxu0 0.0
    %2018 = vmatpush1.msra.mxu0 0.0
    %2019 = vmatprep.subr.mxu0 0.0
    %2020 = vmatpush1.msra.mxu0 0.0
    %2021 = vmatprep.subr.mxu0 0.0
    %2022 = vmatpush1.msra.mxu0 0.0
    %2023 = vmatprep.subr.mxu0 0.0
    %2024 = vmatpush1.msra.mxu0 0.0
    %2025 = vmatprep.subr.mxu0 0.0
    %2026 = vmatpush1.msra.mxu0 0.0
    %2027 = vmatprep.subr.mxu0 0.0
    %2028 = vmatpush1.msra.mxu0 0.0
    %2029 = vmatprep.subr.mxu0 0.0
    %2030 = vmatpush1.msra.mxu0 0.0
    %2031 = vmatprep.subr.mxu0 0.0
    %2032 = vmatpush1.msra.mxu0 0.0
    %2033 = vmatprep.subr.mxu0 0.0
    %2034 = vmatpush1.msra.mxu0 0.0
    %2035 = vmatprep.subr.mxu0 0.0
    %2036 = vmatpush1.msra.mxu0 0.0
    %2037 = vmatprep.subr.mxu0 0.0
    %2038 = vmatpush1.msra.mxu0 0.0
    %2039 = vmatprep.subr.mxu0 0.0
    %2040 = vmatpush1.msra.mxu0 0.0
    %2041 = vmatprep.subr.mxu0 0.0
    %2042 = vmatpush1.msra.mxu0 0.0
    %2043 = vmatprep.subr.mxu0 0.0
    %2044 = vmatpush1.msra.mxu0 0.0
    %2045 = vmatprep.subr.mxu0 0.0
    %2046 = vmatpush1.msra.mxu0 0.0
    %2047 = vmatprep.subr.mxu0 0.0
    %2048 = vmatpush1.msra.mxu0 0.0
    %2049 = vmatprep.subr.mxu0 0.0
    %2050 = vmatpush1.msra.mxu0 0.0
    %2051 = vmatprep.subr.mxu0 0.0
    %2052 = vmatpush1.msra.mxu0 0.0
    %2053 = vmatprep.subr.mxu0 0.0
    %2054 = vmatpush1.msra.mxu0 0.0
    %2055 = vmatprep.subr.mxu0 0.0
    %2056 = vmatpush1.msra.mxu0 0.0
    %2057 = vmatprep.subr.mxu0 0.0
    %2058 = vmatpush1.msra.mxu0 0.0
    %2059 = vmatprep.subr.mxu0 0.0
    %2060 = vmatpush1.msra.mxu0 0.0
    %2061 = vmatprep.subr.mxu0 0.0
    %2062 = vmatpush1.msra.mxu0 0.0
    %2063 = vmatprep.subr.mxu0 0.0
    %2064 = vmatpush1.msra.mxu0 0.0
    %2065 = vmatprep.subr.mxu0 0.0
    %2066 = vmatpush1.msra.mxu0 0.0
    %2067 = vmatprep.subr.mxu0 0.0
    %2068 = vmatpush1.msra.mxu0 0.0
    %2069 = vmatprep.subr.mxu0 0.0
    %2070 = vmatpush1.msra.mxu0 0.0
    %2071 = vmatprep.subr.mxu0 0.0
    %2072 = vmatpush1.msra.mxu0 0.0
    %2073 = vmatprep.mubr.f32.mxu0 0.0
    %2074 = vmatmul.mubr.f32.gmra.mrb[0].mxu0 %v2007
    %v2075 = vpop.f32.mrb[0].mxu0
    %v2076 = vadd.f32 0.0, %v2075
    %v2077 = vpop.f32.mrb[0].mxu0
    %2078 = vdwg.mxu0
    %v2080 = vsel %vm1001, %v1711, 0
    %2082 = vmatprep.subr.mxu0 0.0
    %2083 = vmatpush1.msra.mxu0 %v997
    %2084 = vmatprep.subr.mxu0 0.0
    %2085 = vmatpush1.msra.mxu0 0.0
    %2086 = vmatprep.subr.mxu0 0.0
    %2087 = vmatpush1.msra.mxu0 0.0
    %2088 = vmatprep.subr.mxu0 0.0
    %2089 = vmatpush1.msra.mxu0 0.0
    %2090 = vmatprep.subr.mxu0 0.0
    %2091 = vmatpush1.msra.mxu0 0.0
    %2092 = vmatprep.subr.mxu0 0.0
    %2093 = vmatpush1.msra.mxu0 0.0
    %2094 = vmatprep.subr.mxu0 0.0
    %2095 = vmatpush1.msra.mxu0 0.0
    %2096 = vmatprep.subr.mxu0 0.0
    %2097 = vmatpush1.msra.mxu0 0.0
    %2098 = vmatprep.subr.mxu0 0.0
    %2099 = vmatpush1.msra.mxu0 0.0
    %2100 = vmatprep.subr.mxu0 0.0
    %2101 = vmatpush1.msra.mxu0 0.0
    %2102 = vmatprep.subr.mxu0 0.0
    %2103 = vmatpush1.msra.mxu0 0.0
    %2104 = vmatprep.subr.mxu0 0.0
    %2105 = vmatpush1.msra.mxu0 0.0
    %2106 = vmatprep.subr.mxu0 0.0
    %2107 = vmatpush1.msra.mxu0 0.0
    %2108 = vmatprep.subr.mxu0 0.0
    %2109 = vmatpush1.msra.mxu0 0.0
    %2110 = vmatprep.subr.mxu0 0.0
    %2111 = vmatpush1.msra.mxu0 0.0
    %2112 = vmatprep.subr.mxu0 0.0
    %2113 = vmatpush1.msra.mxu0 0.0
    %2114 = vmatprep.subr.mxu0 0.0
    %2115 = vmatpush1.msra.mxu0 0.0
    %2116 = vmatprep.subr.mxu0 0.0
    %2117 = vmatpush1.msra.mxu0 0.0
    %2118 = vmatprep.subr.mxu0 0.0
    %2119 = vmatpush1.msra.mxu0 0.0
    %2120 = vmatprep.subr.mxu0 0.0
    %2121 = vmatpush1.msra.mxu0 0.0
    %2122 = vmatprep.subr.mxu0 0.0
    %2123 = vmatpush1.msra.mxu0 0.0
    %2124 = vmatprep.subr.mxu0 0.0
    %2125 = vmatpush1.msra.mxu0 0.0
    %2126 = vmatprep.subr.mxu0 0.0
    %2127 = vmatpush1.msra.mxu0 0.0
    %2128 = vmatprep.subr.mxu0 0.0
    %2129 = vmatpush1.msra.mxu0 0.0
    %2130 = vmatprep.subr.mxu0 0.0
    %2131 = vmatpush1.msra.mxu0 0.0
    %2132 = vmatprep.subr.mxu0 0.0
    %2133 = vmatpush1.msra.mxu0 0.0
    %2134 = vmatprep.subr.mxu0 0.0
    %2135 = vmatpush1.msra.mxu0 0.0
    %2136 = vmatprep.subr.mxu0 0.0
    %2137 = vmatpush1.msra.mxu0 0.0
    %2138 = vmatprep.subr.mxu0 0.0
    %2139 = vmatpush1.msra.mxu0 0.0
    %2140 = vmatprep.subr.mxu0 0.0
    %2141 = vmatpush1.msra.mxu0 0.0
    %2142 = vmatprep.subr.mxu0 0.0
    %2143 = vmatpush1.msra.mxu0 0.0
    %2144 = vmatprep.subr.mxu0 0.0
    %2145 = vmatpush1.msra.mxu0 0.0
    %2146 = vmatprep.mubr.f32.mxu0 0.0
    %2147 = vmatmul.mubr.f32.gmra.mrb[0].mxu0 %v2080
    %v2148 = vpop.f32.mrb[0].mxu0
    %v2149 = vadd.f32 0.0, %v2148
    %v2150 = vpop.f32.mrb[0].mxu0
    %2151 = vdwg.mxu0
    %v2153 = vsel %vm1001, %v1712, 0
    %2155 = vmatprep.subr.mxu0 0.0
    %2156 = vmatpush1.msra.mxu0 %v998
    %2157 = vmatprep.subr.mxu0 0.0
    %2158 = vmatpush1.msra.mxu0 0.0
    %2159 = vmatprep.subr.mxu0 0.0
    %2160 = vmatpush1.msra.mxu0 0.0
    %2161 = vmatprep.subr.mxu0 0.0
    %2162 = vmatpush1.msra.mxu0 0.0
    %2163 = vmatprep.subr.mxu0 0.0
    %2164 = vmatpush1.msra.mxu0 0.0
    %2165 = vmatprep.subr.mxu0 0.0
    %2166 = vmatpush1.msra.mxu0 0.0
    %2167 = vmatprep.subr.mxu0 0.0
    %2168 = vmatpush1.msra.mxu0 0.0
    %2169 = vmatprep.subr.mxu0 0.0
    %2170 = vmatpush1.msra.mxu0 0.0
    %2171 = vmatprep.subr.mxu0 0.0
    %2172 = vmatpush1.msra.mxu0 0.0
    %2173 = vmatprep.subr.mxu0 0.0
    %2174 = vmatpush1.msra.mxu0 0.0
    %2175 = vmatprep.subr.mxu0 0.0
    %2176 = vmatpush1.msra.mxu0 0.0
    %2177 = vmatprep.subr.mxu0 0.0
    %2178 = vmatpush1.msra.mxu0 0.0
    %2179 = vmatprep.subr.mxu0 0.0
    %2180 = vmatpush1.msra.mxu0 0.0
    %2181 = vmatprep.subr.mxu0 0.0
    %2182 = vmatpush1.msra.mxu0 0.0
    %2183 = vmatprep.subr.mxu0 0.0
    %2184 = vmatpush1.msra.mxu0 0.0
    %2185 = vmatprep.subr.mxu0 0.0
    %2186 = vmatpush1.msra.mxu0 0.0
    %2187 = vmatprep.subr.mxu0 0.0
    %2188 = vmatpush1.msra.mxu0 0.0
    %2189 = vmatprep.subr.mxu0 0.0
    %2190 = vmatpush1.msra.mxu0 0.0
    %2191 = vmatprep.subr.mxu0 0.0
    %2192 = vmatpush1.msra.mxu0 0.0
    %2193 = vmatprep.subr.mxu0 0.0
    %2194 = vmatpush1.msra.mxu0 0.0
    %2195 = vmatprep.subr.mxu0 0.0
    %2196 = vmatpush1.msra.mxu0 0.0
    %2197 = vmatprep.subr.mxu0 0.0
    %2198 = vmatpush1.msra.mxu0 0.0
    %2199 = vmatprep.subr.mxu0 0.0
    %2200 = vmatpush1.msra.mxu0 0.0
    %2201 = vmatprep.subr.mxu0 0.0
    %2202 = vmatpush1.msra.mxu0 0.0
    %2203 = vmatprep.subr.mxu0 0.0
    %2204 = vmatpush1.msra.mxu0 0.0
    %2205 = vmatprep.subr.mxu0 0.0
    %2206 = vmatpush1.msra.mxu0 0.0
    %2207 = vmatprep.subr.mxu0 0.0
    %2208 = vmatpush1.msra.mxu0 0.0
    %2209 = vmatprep.subr.mxu0 0.0
    %2210 = vmatpush1.msra.mxu0 0.0
    %2211 = vmatprep.subr.mxu0 0.0
    %2212 = vmatpush1.msra.mxu0 0.0
    %2213 = vmatprep.subr.mxu0 0.0
    %2214 = vmatpush1.msra.mxu0 0.0
    %2215 = vmatprep.subr.mxu0 0.0
    %2216 = vmatpush1.msra.mxu0 0.0
    %2217 = vmatprep.subr.mxu0 0.0
    %2218 = vmatpush1.msra.mxu0 0.0
    %2219 = vmatprep.mubr.f32.mxu0 0.0
    %2220 = vmatmul.mubr.f32.gmra.mrb[0].mxu0 %v2153
    %v2221 = vpop.f32.mrb[0].mxu0
    %v2222 = vadd.f32 0.0, %v2221
    %v2223 = vpop.f32.mrb[0].mxu0
    %2224 = vdwg.mxu0
    %v2226 = vsel %vm1001, %v1713, 0
    %2228 = vmatprep.subr.mxu0 0.0
    %2229 = vmatpush1.msra.mxu0 %v999
    %2230 = vmatprep.subr.mxu0 0.0
    %2231 = vmatpush1.msra.mxu0 0.0
    %2232 = vmatprep.subr.mxu0 0.0
    %2233 = vmatpush1.msra.mxu0 0.0
    %2234 = vmatprep.subr.mxu0 0.0
    %2235 = vmatpush1.msra.mxu0 0.0
    %2236 = vmatprep.subr.mxu0 0.0
    %2237 = vmatpush1.msra.mxu0 0.0
    %2238 = vmatprep.subr.mxu0 0.0
    %2239 = vmatpush1.msra.mxu0 0.0
    %2240 = vmatprep.subr.mxu0 0.0
    %2241 = vmatpush1.msra.mxu0 0.0
    %2242 = vmatprep.subr.mxu0 0.0
    %2243 = vmatpush1.msra.mxu0 0.0
    %2244 = vmatprep.subr.mxu0 0.0
    %2245 = vmatpush1.msra.mxu0 0.0
    %2246 = vmatprep.subr.mxu0 0.0
    %2247 = vmatpush1.msra.mxu0 0.0
    %2248 = vmatprep.subr.mxu0 0.0
    %2249 = vmatpush1.msra.mxu0 0.0
    %2250 = vmatprep.subr.mxu0 0.0
    %2251 = vmatpush1.msra.mxu0 0.0
    %2252 = vmatprep.subr.mxu0 0.0
    %2253 = vmatpush1.msra.mxu0 0.0
    %2254 = vmatprep.subr.mxu0 0.0
    %2255 = vmatpush1.msra.mxu0 0.0
    %2256 = vmatprep.subr.mxu0 0.0
    %2257 = vmatpush1.msra.mxu0 0.0
    %2258 = vmatprep.subr.mxu0 0.0
    %2259 = vmatpush1.msra.mxu0 0.0
    %2260 = vmatprep.subr.mxu0 0.0
    %2261 = vmatpush1.msra.mxu0 0.0
    %2262 = vmatprep.subr.mxu0 0.0
    %2263 = vmatpush1.msra.mxu0 0.0
    %2264 = vmatprep.subr.mxu0 0.0
    %2265 = vmatpush1.msra.mxu0 0.0
    %2266 = vmatprep.subr.mxu0 0.0
    %2267 = vmatpush1.msra.mxu0 0.0
    %2268 = vmatprep.subr.mxu0 0.0
    %2269 = vmatpush1.msra.mxu0 0.0
    %2270 = vmatprep.subr.mxu0 0.0
    %2271 = vmatpush1.msra.mxu0 0.0
    %2272 = vmatprep.subr.mxu0 0.0
    %2273 = vmatpush1.msra.mxu0 0.0
    %2274 = vmatprep.subr.mxu0 0.0
    %2275 = vmatpush1.msra.mxu0 0.0
    %2276 = vmatprep.subr.mxu0 0.0
    %2277 = vmatpush1.msra.mxu0 0.0
    %2278 = vmatprep.subr.mxu0 0.0
    %2279 = vmatpush1.msra.mxu0 0.0
    %2280 = vmatprep.subr.mxu0 0.0
    %2281 = vmatpush1.msra.mxu0 0.0
    %2282 = vmatprep.subr.mxu0 0.0
    %2283 = vmatpush1.msra.mxu0 0.0
    %2284 = vmatprep.subr.mxu0 0.0
    %2285 = vmatpush1.msra.mxu0 0.0
    %2286 = vmatprep.subr.mxu0 0.0
    %2287 = vmatpush1.msra.mxu0 0.0
    %2288 = vmatprep.subr.mxu0 0.0
    %2289 = vmatpush1.msra.mxu0 0.0
    %2290 = vmatprep.subr.mxu0 0.0
    %2291 = vmatpush1.msra.mxu0 0.0
    %2292 = vmatprep.mubr.f32.mxu0 0.0
    %2293 = vmatmul.mubr.f32.gmra.mrb[0].mxu0 %v2226
    %v2294 = vpop.f32.mrb[0].mxu0
    %v2295 = vadd.f32 0.0, %v2294
    %v2296 = vpop.f32.mrb[0].mxu0
    %2297 = vdwg.mxu0
    %v2298 = vcombine.low %v1784, %v1930
    %v2299 = vcombine.high %v1784, %v1930
    %v2301 = vunpack.c.l.s4 1983009808
    %v2302 = vunpack.c.0.s8 %v2301
    %v2303 = vlaneseq
    %v2304 = vshrl.u32 %v2303, 7
    %v2305 = vsub.s32 %v2302, %v2304
    %v2306 = vrot.slane %v2298, %v2305
    %v2308 = vunpack.c.l.s4 1983009808
    %v2309 = vunpack.c.0.s8 %v2308
    %v2310 = vlaneseq
    %v2311 = vshrl.u32 %v2310, 7
    %v2312 = vsub.s32 %v2309, %v2311
    %v2313 = vrot.slane %v2299, %v2312
    %v2314 = vcombine.low %v1857, %v2003
    %v2315 = vcombine.high %v1857, %v2003
    %v2317 = vunpack.c.l.s4 1983009808
    %v2318 = vunpack.c.0.s8 %v2317
    %v2319 = vlaneseq
    %v2320 = vshrl.u32 %v2319, 7
    %v2321 = vsub.s32 %v2318, %v2320
    %v2322 = vrot.slane %v2314, %v2321
    %v2324 = vunpack.c.l.s4 1983009808
    %v2325 = vunpack.c.0.s8 %v2324
    %v2326 = vlaneseq
    %v2327 = vshrl.u32 %v2326, 7
    %v2328 = vsub.s32 %v2325, %v2327
    %v2329 = vrot.slane %v2315, %v2328
    %v2330 = vcombine.low %v2306, %v2322
    %v2331 = vcombine.high %v2306, %v2322
    %v2333 = vunpack.c.l.s4 1934713408
    %v2334 = vunpack.c.0.s8 %v2333
    %v2335 = vlaneseq
    %v2336 = vshrl.u32 %v2335, 7
    %v2337 = vsub.s32 %v2334, %v2336
    %v2338 = vrot.slane %v2330, %v2337
    %v2340 = vunpack.c.l.s4 1934713408
    %v2341 = vunpack.c.0.s8 %v2340
    %v2342 = vlaneseq
    %v2343 = vshrl.u32 %v2342, 7
    %v2344 = vsub.s32 %v2341, %v2343
    %v2345 = vrot.slane %v2331, %v2344
    %v2346 = vcombine.low %v2313, %v2329
    %v2347 = vcombine.high %v2313, %v2329
    %v2349 = vunpack.c.l.s4 1934713408
    %v2350 = vunpack.c.0.s8 %v2349
    %v2351 = vlaneseq
    %v2352 = vshrl.u32 %v2351, 7
    %v2353 = vsub.s32 %v2350, %v2352
    %v2354 = vrot.slane %v2346, %v2353
    %v2356 = vunpack.c.l.s4 1934713408
    %v2357 = vunpack.c.0.s8 %v2356
    %v2358 = vlaneseq
    %v2359 = vshrl.u32 %v2358, 7
    %v2360 = vsub.s32 %v2357, %v2359
    %v2361 = vrot.slane %v2347, %v2360
    %v2362 = vcombine.high %v2338, 0.0
    %v2363 = vcombine.high %v2345, 0.0
    %v2364 = vcombine.high %v2354, 0.0
    %v2365 = vcombine.high %v2361, 0.0
    %v2366 = vcombine.low %v2076, %v2222
    %v2367 = vcombine.high %v2076, %v2222
    %v2369 = vunpack.c.l.s4 1983009808
    %v2370 = vunpack.c.0.s8 %v2369
    %v2371 = vlaneseq
    %v2372 = vshrl.u32 %v2371, 7
    %v2373 = vsub.s32 %v2370, %v2372
    %v2374 = vrot.slane %v2366, %v2373
    %v2376 = vunpack.c.l.s4 1983009808
    %v2377 = vunpack.c.0.s8 %v2376
    %v2378 = vlaneseq
    %v2379 = vshrl.u32 %v2378, 7
    %v2380 = vsub.s32 %v2377, %v2379
    %v2381 = vrot.slane %v2367, %v2380
    %v2382 = vcombine.low %v2149, %v2295
    %v2383 = vcombine.high %v2149, %v2295
    %v2385 = vunpack.c.l.s4 1983009808
    %v2386 = vunpack.c.0.s8 %v2385
    %v2387 = vlaneseq
    %v2388 = vshrl.u32 %v2387, 7
    %v2389 = vsub.s32 %v2386, %v2388
    %v2390 = vrot.slane %v2382, %v2389
    %v2392 = vunpack.c.l.s4 1983009808
    %v2393 = vunpack.c.0.s8 %v2392
    %v2394 = vlaneseq
    %v2395 = vshrl.u32 %v2394, 7
    %v2396 = vsub.s32 %v2393, %v2395
    %v2397 = vrot.slane %v2383, %v2396
    %v2398 = vcombine.low %v2374, %v2390
    %v2399 = vcombine.high %v2374, %v2390
    %v2401 = vunpack.c.l.s4 1934713408
    %v2402 = vunpack.c.0.s8 %v2401
    %v2403 = vlaneseq
    %v2404 = vshrl.u32 %v2403, 7
    %v2405 = vsub.s32 %v2402, %v2404
    %v2406 = vrot.slane %v2398, %v2405
    %v2408 = vunpack.c.l.s4 1934713408
    %v2409 = vunpack.c.0.s8 %v2408
    %v2410 = vlaneseq
    %v2411 = vshrl.u32 %v2410, 7
    %v2412 = vsub.s32 %v2409, %v2411
    %v2413 = vrot.slane %v2399, %v2412
    %v2414 = vcombine.low %v2381, %v2397
    %v2415 = vcombine.high %v2381, %v2397
    %v2417 = vunpack.c.l.s4 1934713408
    %v2418 = vunpack.c.0.s8 %v2417
    %v2419 = vlaneseq
    %v2420 = vshrl.u32 %v2419, 7
    %v2421 = vsub.s32 %v2418, %v2420
    %v2422 = vrot.slane %v2414, %v2421
    %v2424 = vunpack.c.l.s4 1934713408
    %v2425 = vunpack.c.0.s8 %v2424
    %v2426 = vlaneseq
    %v2427 = vshrl.u32 %v2426, 7
    %v2428 = vsub.s32 %v2425, %v2427
    %v2429 = vrot.slane %v2415, %v2428
    %v2430 = vcombine.high %v2406, 0.0
    %v2431 = vcombine.high %v2413, 0.0
    %v2432 = vcombine.high %v2422, 0.0
    %v2433 = vcombine.high %v2429, 0.0
    %v2434 = vcombine.low %v2338, %v2345
    %v2436 = vunpack.c.l.s4 1983009808
    %v2437 = vunpack.c.0.s8 %v2436
    %v2438 = vlaneseq
    %v2439 = vshrl.u32 %v2438, 7
    %v2440 = vsub.s32 %v2437, %v2439
    %v2441 = vrot.slane %v2434, %v2440
    %v2442 = vcombine.low %v2362, %v2363
    %v2444 = vunpack.c.l.s4 1983009808
    %v2445 = vunpack.c.0.s8 %v2444
    %v2446 = vlaneseq
    %v2447 = vshrl.u32 %v2446, 7
    %v2448 = vsub.s32 %v2445, %v2447
    %v2449 = vrot.slane %v2442, %v2448
    %v2450 = vcombine.low %v2354, %v2361
    %v2452 = vunpack.c.l.s4 1983009808
    %v2453 = vunpack.c.0.s8 %v2452
    %v2454 = vlaneseq
    %v2455 = vshrl.u32 %v2454, 7
    %v2456 = vsub.s32 %v2453, %v2455
    %v2457 = vrot.slane %v2450, %v2456
    %v2458 = vcombine.low %v2364, %v2365
    %v2460 = vunpack.c.l.s4 1983009808
    %v2461 = vunpack.c.0.s8 %v2460
    %v2462 = vlaneseq
    %v2463 = vshrl.u32 %v2462, 7
    %v2464 = vsub.s32 %v2461, %v2463
    %v2465 = vrot.slane %v2458, %v2464
    %v2466 = vcombine.low %v2441, %v2449
    %v2467 = vcombine.high %v2441, %v2449
    %v2469 = vunpack.c.l.s4 1934713408
    %v2470 = vunpack.c.0.s8 %v2469
    %v2471 = vlaneseq
    %v2472 = vshrl.u32 %v2471, 7
    %v2473 = vsub.s32 %v2470, %v2472
    %v2474 = vrot.slane %v2466, %v2473
    %v2476 = vunpack.c.l.s4 1934713408
    %v2477 = vunpack.c.0.s8 %v2476
    %v2478 = vlaneseq
    %v2479 = vshrl.u32 %v2478, 7
    %v2480 = vsub.s32 %v2477, %v2479
    %v2481 = vrot.slane %v2467, %v2480
    %v2482 = vcombine.low %v2457, %v2465
    %v2483 = vcombine.high %v2457, %v2465
    %v2485 = vunpack.c.l.s4 1934713408
    %v2486 = vunpack.c.0.s8 %v2485
    %v2487 = vlaneseq
    %v2488 = vshrl.u32 %v2487, 7
    %v2489 = vsub.s32 %v2486, %v2488
    %v2490 = vrot.slane %v2482, %v2489
    %v2492 = vunpack.c.l.s4 1934713408
    %v2493 = vunpack.c.0.s8 %v2492
    %v2494 = vlaneseq
    %v2495 = vshrl.u32 %v2494, 7
    %v2496 = vsub.s32 %v2493, %v2495
    %v2497 = vrot.slane %v2483, %v2496
    %v2498 = vcombine.low %v2474, %v2490
    %v2499 = vcombine.high %v2474, %v2490
    %v2500 = vcombine.low %v2481, %v2497
    %v2501 = vcombine.high %v2481, %v2497
    %v2502 = vcombine.low %v2406, %v2413
    %v2504 = vunpack.c.l.s4 1983009808
    %v2505 = vunpack.c.0.s8 %v2504
    %v2506 = vlaneseq
    %v2507 = vshrl.u32 %v2506, 7
    %v2508 = vsub.s32 %v2505, %v2507
    %v2509 = vrot.slane %v2502, %v2508
    %v2510 = vcombine.low %v2430, %v2431
    %v2512 = vunpack.c.l.s4 1983009808
    %v2513 = vunpack.c.0.s8 %v2512
    %v2514 = vlaneseq
    %v2515 = vshrl.u32 %v2514, 7
    %v2516 = vsub.s32 %v2513, %v2515
    %v2517 = vrot.slane %v2510, %v2516
    %v2518 = vcombine.low %v2422, %v2429
    %v2520 = vunpack.c.l.s4 1983009808
    %v2521 = vunpack.c.0.s8 %v2520
    %v2522 = vlaneseq
    %v2523 = vshrl.u32 %v2522, 7
    %v2524 = vsub.s32 %v2521, %v2523
    %v2525 = vrot.slane %v2518, %v2524
    %v2526 = vcombine.low %v2432, %v2433
    %v2528 = vunpack.c.l.s4 1983009808
    %v2529 = vunpack.c.0.s8 %v2528
    %v2530 = vlaneseq
    %v2531 = vshrl.u32 %v2530, 7
    %v2532 = vsub.s32 %v2529, %v2531
    %v2533 = vrot.slane %v2526, %v2532
    %v2534 = vcombine.low %v2509, %v2517
    %v2535 = vcombine.high %v2509, %v2517
    %v2537 = vunpack.c.l.s4 1934713408
    %v2538 = vunpack.c.0.s8 %v2537
    %v2539 = vlaneseq
    %v2540 = vshrl.u32 %v2539, 7
    %v2541 = vsub.s32 %v2538, %v2540
    %v2542 = vrot.slane %v2534, %v2541
    %v2544 = vunpack.c.l.s4 1934713408
    %v2545 = vunpack.c.0.s8 %v2544
    %v2546 = vlaneseq
    %v2547 = vshrl.u32 %v2546, 7
    %v2548 = vsub.s32 %v2545, %v2547
    %v2549 = vrot.slane %v2535, %v2548
    %v2550 = vcombine.low %v2525, %v2533
    %v2551 = vcombine.high %v2525, %v2533
    %v2553 = vunpack.c.l.s4 1934713408
    %v2554 = vunpack.c.0.s8 %v2553
    %v2555 = vlaneseq
    %v2556 = vshrl.u32 %v2555, 7
    %v2557 = vsub.s32 %v2554, %v2556
    %v2558 = vrot.slane %v2550, %v2557
    %v2560 = vunpack.c.l.s4 1934713408
    %v2561 = vunpack.c.0.s8 %v2560
    %v2562 = vlaneseq
    %v2563 = vshrl.u32 %v2562, 7
    %v2564 = vsub.s32 %v2561, %v2563
    %v2565 = vrot.slane %v2551, %v2564
    %v2566 = vcombine.low %v2542, %v2558
    %v2567 = vcombine.high %v2542, %v2558
    %v2568 = vcombine.low %v2549, %v2565
    %v2569 = vcombine.high %v2549, %v2565
    %2572 = vrot.lane.b32.xlu0 %v2499, 8
    %v2573 = vpop.permute.xlu0 %2572
    %2574 = vrot.lane.b32.xlu0 %v2567, 8
    %v2575 = vpop.permute.xlu0 %2574
    %2580 = vrot.lane.b32.xlu0 %v2500, 16
    %v2581 = vpop.permute.xlu0 %2580
    %2582 = vrot.lane.b32.xlu0 %v2568, 16
    %v2583 = vpop.permute.xlu0 %2582
    %2588 = vrot.lane.b32.xlu0 %v2501, 24
    %v2589 = vpop.permute.xlu0 %2588
    %2590 = vrot.lane.b32.xlu0 %v2569, 24
    %v2591 = vpop.permute.xlu0 %2590
    %v2594 = vsel %vm1001, %v2498, %v2573
    %v2595 = vsel %vm1001, %v2566, %v2575
    %vm2596 = vcmask 130048
    %v2597 = vsel %vm2596, %v2594, %v2581
    %v2598 = vsel %vm2596, %v2595, %v2583
    %vm2599 = vcmask 195584
    %v2600 = vsel %vm2599, %v2597, %v2589
    %v2601 = vsel %vm2599, %v2598, %v2591
    %v2602 = vld [vmem:[%s3] sm:$0xff]
    %v2603 = vld [vmem:[%s3 + $0x8] sm:$0xff]
    %v2604 = vld [vmem:[%s3 + $0x10] sm:$0xff]
    %v2605 = vld [vmem:[%s3 + $0x18] sm:$0xff]
    %v2606 = vld [vmem:[%s2] sm:$0x1]
    %v2608 = vlaneseq
    %v2609 = vshrl.u32 %v2608, 7
    %v2610 = vsub.s32 0, %v2609
    %v2611 = vrot.slane %v2606, %v2610
    %2612 = vrot.lane.b32.xlu0 %v2611, 32
    %v2613 = vpop.permute.xlu0 %2612
    %v2616 = vsel %vm34, %v2600, 0
    %v2619 = vsel %vm34, %v2601, 0
    %2621 = vmatprep.subr.mxu0 0.0
    %2622 = vmatpush1.msra.mxu0 %v2602
    %2623 = vmatprep.subr.mxu0 0.0
    %2624 = vmatpush1.msra.mxu0 %v2603
    %2625 = vmatprep.subr.mxu0 0.0
    %2626 = vmatpush1.msra.mxu0 %v2604
    %2627 = vmatprep.subr.mxu0 0.0
    %2628 = vmatpush1.msra.mxu0 %v2605
    %2629 = vmatprep.subr.mxu0 0.0
    %2630 = vmatpush1.msra.mxu0 0.0
    %2631 = vmatprep.subr.mxu0 0.0
    %2632 = vmatpush1.msra.mxu0 0.0
    %2633 = vmatprep.subr.mxu0 0.0
    %2634 = vmatpush1.msra.mxu0 0.0
    %2635 = vmatprep.subr.mxu0 0.0
    %2636 = vmatpush1.msra.mxu0 0.0
    %2637 = vmatprep.subr.mxu0 0.0
    %2638 = vmatpush1.msra.mxu0 0.0
    %2639 = vmatprep.subr.mxu0 0.0
    %2640 = vmatpush1.msra.mxu0 0.0
    %2641 = vmatprep.subr.mxu0 0.0
    %2642 = vmatpush1.msra.mxu0 0.0
    %2643 = vmatprep.subr.mxu0 0.0
    %2644 = vmatpush1.msra.mxu0 0.0
    %2645 = vmatprep.subr.mxu0 0.0
    %2646 = vmatpush1.msra.mxu0 0.0
    %2647 = vmatprep.subr.mxu0 0.0
    %2648 = vmatpush1.msra.mxu0 0.0
    %2649 = vmatprep.subr.mxu0 0.0
    %2650 = vmatpush1.msra.mxu0 0.0
    %2651 = vmatprep.subr.mxu0 0.0
    %2652 = vmatpush1.msra.mxu0 0.0
    %2653 = vmatprep.subr.mxu0 0.0
    %2654 = vmatpush1.msra.mxu0 0.0
    %2655 = vmatprep.subr.mxu0 0.0
    %2656 = vmatpush1.msra.mxu0 0.0
    %2657 = vmatprep.subr.mxu0 0.0
    %2658 = vmatpush1.msra.mxu0 0.0
    %2659 = vmatprep.subr.mxu0 0.0
    %2660 = vmatpush1.msra.mxu0 0.0
    %2661 = vmatprep.subr.mxu0 0.0
    %2662 = vmatpush1.msra.mxu0 0.0
    %2663 = vmatprep.subr.mxu0 0.0
    %2664 = vmatpush1.msra.mxu0 0.0
    %2665 = vmatprep.subr.mxu0 0.0
    %2666 = vmatpush1.msra.mxu0 0.0
    %2667 = vmatprep.subr.mxu0 0.0
    %2668 = vmatpush1.msra.mxu0 0.0
    %2669 = vmatprep.subr.mxu0 0.0
    %2670 = vmatpush1.msra.mxu0 0.0
    %2671 = vmatprep.subr.mxu0 0.0
    %2672 = vmatpush1.msra.mxu0 0.0
    %2673 = vmatprep.subr.mxu0 0.0
    %2674 = vmatpush1.msra.mxu0 0.0
    %2675 = vmatprep.subr.mxu0 0.0
    %2676 = vmatpush1.msra.mxu0 0.0
    %2677 = vmatprep.subr.mxu0 0.0
    %2678 = vmatpush1.msra.mxu0 0.0
    %2679 = vmatprep.subr.mxu0 0.0
    %2680 = vmatpush1.msra.mxu0 0.0
    %2681 = vmatprep.subr.mxu0 0.0
    %2682 = vmatpush1.msra.mxu0 0.0
    %2683 = vmatprep.subr.mxu0 0.0
    %2684 = vmatpush1.msra.mxu0 0.0
    %2685 = vmatprep.mubr.f32.mxu0 0.0
    %2686 = vmatmul.mubr.f32.gmra.mrb[0].mxu0 %v2616
    %v2687 = vpop.f32.mrb[0].mxu0
    %v2688 = vadd.f32 %v2613, %v2687
    %v2689 = vpop.f32.mrb[0].mxu0
    %2690 = vmatprep.mubr.f32.mxu0 0.0
    %2691 = vmatmul.mubr.f32.gmra.mrb[0].mxu0 %v2619
    %v2692 = vpop.f32.mrb[0].mxu0
    %v2693 = vadd.f32 %v2613, %v2692
    %v2694 = vpop.f32.mrb[0].mxu0
    %2695 = vdwg.mxu0
    %2696 = vst.msk [vmem:[#allocation2] sm:$0xff] %vm34, %v2688
    %2697 = vst.msk [vmem:[#allocation2 + $0x8] sm:$0xff] %vm34, %v2693
    // Predicated region
    $region22: #{custom_attention.1} parent=1 // pred_check
      _
    $region23: #{custom_attention.1} parent=1 // pred_check_branch
      %2699 = sbr.rel (0) target = $region25
    $region24: #{custom_attention.1} parent=1 // pred_region
      %s2701 = ssub.s32 256, 256
      %2702 = vsyncadd [#allocation3], %s2701
      %s2703 = sshll.u32 [#allocation2], 4
      %s2704 = int_to_ptr.vmem [resolvable:$true] %s2703
      %2709 = dma.vmem_to_hbm [thread:$0]  %s2704, 256, %s5, [#allocation3], 128, 128, 8
    $region25: #{custom_attention.1} parent=1 // pred_fallthru
      _
    // Predicated region
    $region26: #{custom_attention.1} parent=1 // pred_check
      _
    $region27: #{custom_attention.1} parent=1 // pred_check_branch
      %2711 = sbr.rel (0) target = $region29
    $region28: #{custom_attention.1} parent=1 // pred_region
      %2712 = dma.done [#allocation3], 256
    $region29: #{custom_attention.1} parent=1 // pred_fallthru
      _
    %2713 = vsyncpa [#allocation3], 1

</llo_original>
